<compile_context>
chip_gen: v7x
topology: tpu7x:2x2x1
jax: 0.10.0
libtpu: 0.0.40
codegen_flags: <defaults>
</compile_context>

<pallas_src>
import numpy as np
import jax
import jax.numpy as jnp
from jax.experimental import pallas as pl
from jax.experimental.pallas import tpu as pltpu


def _silu(x):
    # sigmoid via exp (EUP) + approx reciprocal (EUP): keeps the divide off the VALU.
    return x * pl.reciprocal(1.0 + jnp.exp(-x), approx=True)


def egnn_kernel(u_ref, ep_ref, eq_ref, cmi_ref, nmlp_ref,
                v_ref, er_ref, et_ref, cmj_ref,
                wenc_ref, w2_ref, w3b_ref, w4_ref, w5_ref,
                hconst_ref, oconst_ref,
                out_nf_ref, out_cupd_ref,
                agg_acc, s_acc, t_acc):
    f32 = jnp.float32
    bf16 = jnp.bfloat16
    jt = pl.program_id(2)

    @pl.when(jt == 0)
    def _init():
        agg_acc[...] = jnp.zeros_like(agg_acc)
        s_acc[...] = jnp.zeros_like(s_acc)
        t_acc[...] = jnp.zeros_like(t_acc)

    u = u_ref[0]            # [TI, H]  nf_i@w1a + cm_i@w1d + b1   (hoisted)
    ep = ep_ref[0]          # [TI, E]  [sin(a_i), cos(a_i)]
    eq = eq_ref[0]          # [TI, E]  [cos(a_i), sin(a_i)]
    v = v_ref[0]            # [TJ, H]  nf_j@w1b - cm_j@w1d        (hoisted)
    er = er_ref[0]          # [TJ, E]  [cos(b_j), cos(b_j)]
    et = et_ref[0]          # [TJ, E]  [-sin(b_j), sin(b_j)]
    cmj = cmj_ref[0]        # [TJ, 3]

    TI, H = u.shape
    TJ = v.shape[0]
    E = ep.shape[-1]

    hc = hconst_ref[...]    # packed [4, H] constants
    b2 = hc[0:1, :]
    b5 = hc[1:2, :]
    w6t = hc[2:3, :]
    b6 = hc[3:4, 0:1]

    # sinusoidal encoding of (res_i - res_j) via the angle-addition identity:
    #   [sin(ai-bj), cos(ai-bj)] = P_i * R_j + Q_i * T_j   (pure VPU work)
    enc = ep[:, None, :] * er[None, :, :] + eq[:, None, :] * et[None, :, :]
    enc_h = jnp.dot(enc.reshape(TI * TJ, E).astype(bf16), wenc_ref[...],
                    preferred_element_type=f32)                  # [TI*TJ, H]

    # decomposed edge-MLP layer 1: per-node terms broadcast onto the pair slab
    h1 = _silu(enc_h.reshape(TI, TJ, H) + u[:, None, :] + v[None, :, :])

    # edge-MLP layer 2 (bf16 operands, f32 accumulation)
    msgs = _silu(jnp.dot(h1.reshape(TI * TJ, H).astype(bf16), w2_ref[...],
                         preferred_element_type=f32) + b2)       # [TI*TJ, H]

    agg_acc[...] += jnp.sum(msgs.reshape(TI, TJ, H), axis=1)

    # coord MLP (kept f32): final [H,1] projection as a VPU multiply + reduce
    ch = _silu(jnp.dot(msgs, w5_ref[...], preferred_element_type=f32) + b5)
    cwk = jnp.sum(ch.reshape(TI, TJ, H) * w6t[None, :, :], axis=-1,
                  keepdims=True) + b6                            # [TI, TJ, 1]

    s_acc[...] += jnp.sum(cwk, axis=1)                           # [TI, 1]
    t_acc[...] += jnp.sum(cwk * cmj[None, :, :], axis=1)         # [TI, 3]

    @pl.when(jt == pl.num_programs(2) - 1)
    def _finalize():
        oc = oconst_ref[...]                                     # packed [3, O]
        b4 = oc[0:1, :]
        ln_g = oc[1:2, :]
        ln_b = oc[2:3, :]
        nmlp = nmlp_ref[0]        # [TI, H] = nf_i @ w3a + b3 (hoisted)
        cmi = cmi_ref[0]          # [TI, 3]

        # node MLP (split concat) + LayerNorm, f32
        h2 = _silu(nmlp + jnp.dot(agg_acc[...], w3b_ref[...],
                                  preferred_element_type=f32))
        y = jnp.dot(h2, w4_ref[...], preferred_element_type=f32) + b4
        mu = jnp.mean(y, axis=-1, keepdims=True)
        var = jnp.mean((y - mu) ** 2, axis=-1, keepdims=True)
        y = (y - mu) * jax.lax.rsqrt(var + 1e-5) * ln_g + ln_b
        out_nf_ref[...] = y[None].astype(out_nf_ref.dtype)

        # cupd_i = (sum_j cw_ij) * cm_i - sum_j cw_ij * cm_j
        cupd = cmi * s_acc[...] - t_acc[...]
        out_cupd_ref[...] = cupd[None].astype(out_cupd_ref.dtype)


def _pick_tile(n, cap):
    """Largest divisor of n that is a multiple of 8 (or n itself) and <= cap."""
    best = None
    for d in range(1, n + 1):
        if n % d != 0 or d > cap:
            continue
        if d % 8 == 0 or d == n:
            best = d
    return best if best is not None else n


def egnn_layer_pallas(coords, node_features, atom_mask, residue_indices,
                      params, edge_embed_dim, max_len,
                      tile_i=None, tile_j=None, vmem_limit_bytes=None):
    f32, bf16 = jnp.float32, jnp.bfloat16

    B, N, A, _ = coords.shape
    F = node_features.shape[-1]
    H = params["w2"].shape[0]
    O = params["w4"].shape[-1]
    E = edge_embed_dim
    assert E % 2 == 0
    E2 = E // 2

    # --- generation-aware VMEM budget / tile sizes ---------------------------
    vmem_cap = 64 * 1024 * 1024            # conservative fallback (v7x-sized)
    try:
        vmem_cap = int(getattr(pltpu.get_tpu_info(), "vmem_capacity_bytes",
                               vmem_cap))
    except Exception:
        pass
    if vmem_limit_bytes is None:
        if vmem_cap <= 64 * 1024 * 1024:      # v7x-class: 64 MiB per TC
            vmem_limit_bytes = 44 * 1024 * 1024
        else:                                 # v5e / v6e: 128 MiB per TC
            vmem_limit_bytes = 100 * 1024 * 1024
    if tile_j is None:
        tile_j = _pick_tile(N, 512)
    if tile_i is None:
        # ~8 simultaneously-live f32 [TI, TJ, max(H,E)] slabs, 50% headroom for
        # double-buffered inputs / weights.
        slab = 8 * tile_j * max(H, E) * 4
        cap_i = max(8, int((vmem_limit_bytes * 0.5) // max(slab, 1)))
        tile_i = _pick_tile(N, min(cap_i, 512))
    assert N % tile_i == 0 and N % tile_j == 0
    n_it, n_jt = N // tile_i, N // tile_j

    coords = coords.astype(f32)
    nf = node_features.astype(f32)
    atom_mask = atom_mask.astype(f32)

    # --- O(B*N) per-node precompute in XLA (hoisted out of the N^2 kernel) ---
    hi = jax.lax.Precision.HIGHEST
    pdot = lambda a, b: jnp.einsum("bnf,fh->bnh", a, b, precision=hi)

    cm = jnp.mean(coords, axis=2)                                  # [B, N, 3]
    inv_freq = 1.0 / (max_len ** (2.0 * jnp.arange(E2, dtype=f32) / E))
    phases = residue_indices.astype(f32)[..., None] * (np.pi * inv_freq)
    S, C = jnp.sin(phases), jnp.cos(phases)                        # [B, N, E2]
    # enc_ij = [sin(ai-bj), cos(ai-bj)] = P_i*R_j + Q_i*T_j  (angle addition)
    P = jnp.concatenate([S, C], axis=-1)
    Q = jnp.concatenate([C, S], axis=-1)
    R = jnp.concatenate([C, C], axis=-1)
    T = jnp.concatenate([-S, S], axis=-1)

    w1 = params["w1"].astype(f32)
    w1a, w1b = w1[:F], w1[F:2 * F]
    w1enc, w1d = w1[2 * F:2 * F + E], w1[2 * F + E:]
    w3 = params["w3"].astype(f32)
    w3a, w3b = w3[:F], w3[F:]

    dirh = pdot(cm, w1d)                                           # [B, N, H]
    u_all = pdot(nf, w1a) + dirh + params["b1"].astype(f32)        # i-side
    v_all = pdot(nf, w1b) - dirh                                   # j-side
    nmlp = pdot(nf, w3a) + params["b3"].astype(f32)                # node-MLP i

    hconst = jnp.concatenate(
        [params["b2"], params["b5"], params["w6"].T,
         jnp.broadcast_to(params["b6"], (1, H))], axis=0).astype(f32)   # [4, H]
    oconst = jnp.concatenate(
        [params["b4"], params["ln_g"], params["ln_b"]], axis=0).astype(f32)  # [3, O]

    wenc = w1enc.astype(bf16)            # fused [E, H] sin|cos encoding weight
    w2b = params["w2"].astype(bf16)
    w4f = params["w4"].astype(f32)
    w5f = params["w5"].astype(f32)       # coord path kept in f32

    def i_spec(d):
        return pl.BlockSpec((1, tile_i, d), lambda b, it, jt: (b, it, 0))

    def j_spec(d):
        return pl.BlockSpec((1, tile_j, d), lambda b, it, jt: (b, jt, 0))

    def c_spec(arr):
        return pl.BlockSpec(arr.shape,
                            lambda b, it, jt, _nd=arr.ndim: (0,) * _nd)

    in_specs = [
        i_spec(H), i_spec(E), i_spec(E), i_spec(3), i_spec(H),   # u, P, Q, cm_i, nmlp
        j_spec(H), j_spec(E), j_spec(E), j_spec(3),              # v, R, T, cm_j
        c_spec(wenc), c_spec(w2b), c_spec(w3b), c_spec(w4f), c_spec(w5f),
        c_spec(hconst), c_spec(oconst),
    ]
    out_specs = [
        pl.BlockSpec((1, tile_i, O), lambda b, it, jt: (b, it, 0)),
        pl.BlockSpec((1, tile_i, 3), lambda b, it, jt: (b, it, 0)),
    ]
    out_shape = [
        jax.ShapeDtypeStruct((B, N, O), f32),
        jax.ShapeDtypeStruct((B, N, 3), f32),
    ]

    fn = pl.pallas_call(
        egnn_kernel,
        grid=(B, n_it, n_jt),
        in_specs=in_specs,
        out_specs=out_specs,
        out_shape=out_shape,
        scratch_shapes=[pltpu.VMEM((tile_i, H), f32),   # message aggregate
                        pltpu.VMEM((tile_i, 1), f32),   # sum_j cw_ij
                        pltpu.VMEM((tile_i, 3), f32)],  # sum_j cw_ij * cm_j
        compiler_params=pltpu.CompilerParams(
            dimension_semantics=("parallel", "parallel", "arbitrary"),
            vmem_limit_bytes=vmem_limit_bytes),
    )
    out_nf, cupd = fn(u_all, P, Q, cm, nmlp, v_all, R, T, cm,
                      wenc, w2b, w3b, w4f, w5f, hconst, oconst)

    # lane-sparse (A,3) coordinate residual applied as a trivial XLA elementwise op
    updated_coords = coords + cupd[:, :, None, :] * atom_mask[..., None]
    return updated_coords, out_nf


def init_params(key, input_nf, hidden_nf, output_nf, edge_embed_dim):
    d_edge = 2 * input_nf + edge_embed_dim + 3
    shapes = {
        "w1": (d_edge, hidden_nf), "b1": (1, hidden_nf),
        "w2": (hidden_nf, hidden_nf), "b2": (1, hidden_nf),
        "w3": (input_nf + hidden_nf, hidden_nf), "b3": (1, hidden_nf),
        "w4": (hidden_nf, output_nf), "b4": (1, output_nf),
        "ln_g": (1, output_nf), "ln_b": (1, output_nf),
        "w5": (hidden_nf, hidden_nf), "b5": (1, hidden_nf),
        "w6": (hidden_nf, 1), "b6": (1, 1),
    }
    params = {}
    keys = jax.random.split(key, len(shapes))
    for k, (name, shp) in zip(keys, shapes.items()):
        if name == "ln_g":
            params[name] = jnp.ones(shp, jnp.float32)
        elif name == "ln_b":
            params[name] = jnp.zeros(shp, jnp.float32)
        else:
            fan_in = shp[0] if name.startswith("w") else shapes["w" + name[1]][0]
            bound = 1.0 / np.sqrt(fan_in)
            params[name] = jax.random.uniform(k, shp, jnp.float32, -bound, bound)
    return params


def egnn_reference(coords, nf, mask, res_idx, params, edge_embed_dim, max_len):
    """Pure-JAX f32 reference mirroring the PyTorch forward pass exactly."""
    B, N, F = nf.shape
    rel = res_idx[:, :, None] - res_idx[:, None, :]
    inv_freq = 1.0 / (max_len ** (2.0 * jnp.arange(edge_embed_dim // 2,
                                                   dtype=jnp.float32)
                                  / edge_embed_dim))
    angles = rel[..., None] * jnp.pi * inv_freq
    enc = jnp.concatenate([jnp.sin(angles), jnp.cos(angles)], axis=-1)
    dirv = (coords[:, :, None, :, :] - coords[:, None, :, :, :]).mean(axis=3)
    ef = jnp.concatenate([
        jnp.broadcast_to(nf[:, :, None, :], (B, N, N, F)),
        jnp.broadcast_to(nf[:, None, :, :], (B, N, N, F)),
        enc, dirv], axis=-1)
    silu = lambda x: x * jax.nn.sigmoid(x)
    dot = lambda a, b: jnp.einsum("...i,ij->...j", a, b,
                                  precision=jax.lax.Precision.HIGHEST)
    msgs = silu(dot(silu(dot(ef, params["w1"]) + params["b1"][0]),
                    params["w2"]) + params["b2"][0])
    agg = msgs.sum(axis=2)
    y = dot(silu(dot(jnp.concatenate([nf, agg], -1), params["w3"])
                 + params["b3"][0]), params["w4"]) + params["b4"][0]
    mu = y.mean(-1, keepdims=True)
    var = ((y - mu) ** 2).mean(-1, keepdims=True)
    y = (y - mu) / jnp.sqrt(var + 1e-5) * params["ln_g"][0] + params["ln_b"][0]
    cw = dot(silu(dot(msgs, params["w5"]) + params["b5"][0]),
             params["w6"]) + params["b6"][0]
    cupd = (cw * dirv).sum(axis=2)
    upd_coords = coords + cupd[:, :, None, :] * mask[..., None]
    return upd_coords, y


if __name__ == "__main__":
    B, N, A = 2, 16, 4
    input_nf, hidden_nf, output_nf = 32, 32, 32
    edge_embed_dim, max_len = 32, 64

    key = jax.random.PRNGKey(0)
    kp, kc, kn, km = jax.random.split(key, 4)

    params = init_params(kp, input_nf, hidden_nf, output_nf, edge_embed_dim)
    coords = jax.random.normal(kc, (B, N, A, 3), jnp.float32)
    node_features = jax.random.normal(kn, (B, N, input_nf), jnp.float32)
    atom_mask = (jax.random.uniform(km, (B, N, A)) > 0.3).astype(jnp.float32)
    residue_indices = jnp.broadcast_to(
        jnp.arange(N, dtype=jnp.float32)[None, :], (B, N))

    # tile_i = tile_j = 8 exercises the full (batch, i-tile, j-tile) grid (2,2,2)
    # with the accumulator init/finalize path.
    out_coords, out_nf = egnn_layer_pallas(
        coords, node_features, atom_mask, residue_indices,
        params, edge_embed_dim, max_len, tile_i=8, tile_j=8)
    jax.block_until_ready(out_coords)
    jax.block_until_ready(out_nf)

    ref_coords, ref_nf = egnn_reference(
        coords, node_features, atom_mask, residue_indices,
        params, edge_embed_dim, max_len)

    assert out_coords.shape == (B, N, A, 3)
    assert out_nf.shape == (B, N, output_nf)
    # bf16 operands on the N^2-row enc/w2 matmuls + approx-reciprocal SiLU
    # -> compare against the f32 reference with a bf16-appropriate tolerance.
    np.testing.assert_allclose(np.asarray(out_coords), np.asarray(ref_coords),
                               rtol=5e-2, atol=5e-2)
    np.testing.assert_allclose(np.asarray(out_nf), np.asarray(ref_nf),
                               rtol=5e-2, atol=5e-2)
    print("KERNEL_OK")
</pallas_src>

<mosaic_0001>
module attributes {stable_mosaic.version = 11 : i64} {
  func.func @egnn_kernel(%arg0: i32, %arg1: i32, %arg2: i32, %arg3: memref<1x8x32xf32, #tpu.memory_space<vmem>>, %arg4: memref<1x8x32xf32, #tpu.memory_space<vmem>>, %arg5: memref<1x8x32xf32, #tpu.memory_space<vmem>>, %arg6: memref<1x8x3xf32, #tpu.memory_space<vmem>>, %arg7: memref<1x8x32xf32, #tpu.memory_space<vmem>>, %arg8: memref<1x8x32xf32, #tpu.memory_space<vmem>>, %arg9: memref<1x8x32xf32, #tpu.memory_space<vmem>>, %arg10: memref<1x8x32xf32, #tpu.memory_space<vmem>>, %arg11: memref<1x8x3xf32, #tpu.memory_space<vmem>>, %arg12: memref<32x32xbf16, #tpu.memory_space<vmem>>, %arg13: memref<32x32xbf16, #tpu.memory_space<vmem>>, %arg14: memref<32x32xf32, #tpu.memory_space<vmem>>, %arg15: memref<32x32xf32, #tpu.memory_space<vmem>>, %arg16: memref<32x32xf32, #tpu.memory_space<vmem>>, %arg17: memref<4x32xf32, #tpu.memory_space<vmem>>, %arg18: memref<3x32xf32, #tpu.memory_space<vmem>>, %arg19: memref<1x8x32xf32, #tpu.memory_space<vmem>>, %arg20: memref<1x8x3xf32, #tpu.memory_space<vmem>>, %arg21: memref<8x32xf32, #tpu.memory_space<vmem>>, %arg22: memref<8x1xf32, #tpu.memory_space<vmem>>, %arg23: memref<8x3xf32, #tpu.memory_space<vmem>>) attributes {dimension_semantics = [#tpu.dimension_semantics<parallel>, #tpu.dimension_semantics<parallel>, #tpu.dimension_semantics<arbitrary>], iteration_bounds = array<i64: 2, 2, 2>, scalar_prefetch = 0 : i64, scratch_operands = 3 : i64, tpu.core_type = #tpu.core_type<tc>, window_params = [{transform_indices = @transform_0, window_bounds = array<i64: 1, 8, 32>}, {transform_indices = @transform_1, window_bounds = array<i64: 1, 8, 32>}, {transform_indices = @transform_2, window_bounds = array<i64: 1, 8, 32>}, {transform_indices = @transform_3, window_bounds = array<i64: 1, 8, 3>}, {transform_indices = @transform_4, window_bounds = array<i64: 1, 8, 32>}, {transform_indices = @transform_5, window_bounds = array<i64: 1, 8, 32>}, {transform_indices = @transform_6, window_bounds = array<i64: 1, 8, 32>}, {transform_indices = @transform_7, window_bounds = array<i64: 1, 8, 32>}, {transform_indices = @transform_8, window_bounds = array<i64: 1, 8, 3>}, {pipeline_mode = #tpu.pipeline_mode<synchronous>, transform_indices = @transform_9, window_bounds = array<i64: 32, 32>}, {pipeline_mode = #tpu.pipeline_mode<synchronous>, transform_indices = @transform_10, window_bounds = array<i64: 32, 32>}, {pipeline_mode = #tpu.pipeline_mode<synchronous>, transform_indices = @transform_11, window_bounds = array<i64: 32, 32>}, {pipeline_mode = #tpu.pipeline_mode<synchronous>, transform_indices = @transform_12, window_bounds = array<i64: 32, 32>}, {pipeline_mode = #tpu.pipeline_mode<synchronous>, transform_indices = @transform_13, window_bounds = array<i64: 32, 32>}, {pipeline_mode = #tpu.pipeline_mode<synchronous>, transform_indices = @transform_14, window_bounds = array<i64: 4, 32>}, {pipeline_mode = #tpu.pipeline_mode<synchronous>, transform_indices = @transform_15, window_bounds = array<i64: 3, 32>}, {transform_indices = @transform_16, window_bounds = array<i64: 1, 8, 32>}, {transform_indices = @transform_17, window_bounds = array<i64: 1, 8, 3>}]} {
    %c0_i32 = arith.constant 0 : i32
    %0 = arith.cmpi eq, %arg2, %c0_i32 : i32
    %1 = arith.extui %0 : i1 to i32
    %c0_i32_0 = arith.constant 0 : i32
    %2 = arith.cmpi ne, %1, %c0_i32_0 : i32
    scf.if %2 {
      %cst_54 = arith.constant 0.000000e+00 : f32
      %104 = vector.broadcast %cst_54 : f32 to vector<8x32xf32>
      %c0_55 = arith.constant 0 : index
      %c0_56 = arith.constant 0 : index
      %105 = vector.load %arg21[%c0_55, %c0_56] : memref<8x32xf32, #tpu.memory_space<vmem>>, vector<8x32xf32>
      tpu.vector_store %arg21[%c0_55, %c0_56], %104 {strides = array<i32>} : memref<8x32xf32, #tpu.memory_space<vmem>>, vector<8x32xf32>,
      %cst_57 = arith.constant 0.000000e+00 : f32
      %106 = vector.broadcast %cst_57 : f32 to vector<8x1xf32>
      %c0_58 = arith.constant 0 : index
      %c0_59 = arith.constant 0 : index
      %107 = vector.load %arg22[%c0_58, %c0_59] : memref<8x1xf32, #tpu.memory_space<vmem>>, vector<8x1xf32>
      tpu.vector_store %arg22[%c0_58, %c0_59], %106 {strides = array<i32>} : memref<8x1xf32, #tpu.memory_space<vmem>>, vector<8x1xf32>,
      %cst_60 = arith.constant 0.000000e+00 : f32
      %108 = vector.broadcast %cst_60 : f32 to vector<8x3xf32>
      %c0_61 = arith.constant 0 : index
      %c0_62 = arith.constant 0 : index
      %109 = vector.load %arg23[%c0_61, %c0_62] : memref<8x3xf32, #tpu.memory_space<vmem>>, vector<8x3xf32>
      tpu.vector_store %arg23[%c0_61, %c0_62], %108 {strides = array<i32>} : memref<8x3xf32, #tpu.memory_space<vmem>>, vector<8x3xf32>,
    } else {
    }
    %c0 = arith.constant 0 : index
    %c0_1 = arith.constant 0 : index
    %c0_2 = arith.constant 0 : index
    %3 = vector.load %arg3[%c0, %c0_1, %c0_2] : memref<1x8x32xf32, #tpu.memory_space<vmem>>, vector<1x8x32xf32>
    %4 = vector.shape_cast %3 : vector<1x8x32xf32> to vector<8x32xf32>
    %c0_3 = arith.constant 0 : index
    %c0_4 = arith.constant 0 : index
    %c0_5 = arith.constant 0 : index
    %5 = vector.load %arg4[%c0_3, %c0_4, %c0_5] : memref<1x8x32xf32, #tpu.memory_space<vmem>>, vector<1x8x32xf32>
    %6 = vector.shape_cast %5 : vector<1x8x32xf32> to vector<8x32xf32>
    %c0_6 = arith.constant 0 : index
    %c0_7 = arith.constant 0 : index
    %c0_8 = arith.constant 0 : index
    %7 = vector.load %arg5[%c0_6, %c0_7, %c0_8] : memref<1x8x32xf32, #tpu.memory_space<vmem>>, vector<1x8x32xf32>
    %8 = vector.shape_cast %7 : vector<1x8x32xf32> to vector<8x32xf32>
    %c0_9 = arith.constant 0 : index
    %c0_10 = arith.constant 0 : index
    %c0_11 = arith.constant 0 : index
    %9 = vector.load %arg8[%c0_9, %c0_10, %c0_11] : memref<1x8x32xf32, #tpu.memory_space<vmem>>, vector<1x8x32xf32>
    %10 = vector.shape_cast %9 : vector<1x8x32xf32> to vector<8x32xf32>
    %c0_12 = arith.constant 0 : index
    %c0_13 = arith.constant 0 : index
    %c0_14 = arith.constant 0 : index
    %11 = vector.load %arg9[%c0_12, %c0_13, %c0_14] : memref<1x8x32xf32, #tpu.memory_space<vmem>>, vector<1x8x32xf32>
    %12 = vector.shape_cast %11 : vector<1x8x32xf32> to vector<8x32xf32>
    %c0_15 = arith.constant 0 : index
    %c0_16 = arith.constant 0 : index
    %c0_17 = arith.constant 0 : index
    %13 = vector.load %arg10[%c0_15, %c0_16, %c0_17] : memref<1x8x32xf32, #tpu.memory_space<vmem>>, vector<1x8x32xf32>
    %14 = vector.shape_cast %13 : vector<1x8x32xf32> to vector<8x32xf32>
    %c0_18 = arith.constant 0 : index
    %c0_19 = arith.constant 0 : index
    %c0_20 = arith.constant 0 : index
    %15 = vector.load %arg11[%c0_18, %c0_19, %c0_20] : memref<1x8x3xf32, #tpu.memory_space<vmem>>, vector<1x8x3xf32>
    %16 = vector.shape_cast %15 : vector<1x8x3xf32> to vector<8x3xf32>
    %c0_21 = arith.constant 0 : index
    %c0_22 = arith.constant 0 : index
    %17 = vector.load %arg17[%c0_21, %c0_22] : memref<4x32xf32, #tpu.memory_space<vmem>>, vector<4x32xf32>
    %18 = vector.extract_strided_slice %17 {offsets = [0, 0], sizes = [1, 32], strides = [1, 1]} : vector<4x32xf32> to vector<1x32xf32>
    %19 = vector.extract_strided_slice %17 {offsets = [1, 0], sizes = [1, 32], strides = [1, 1]} : vector<4x32xf32> to vector<1x32xf32>
    %20 = vector.extract_strided_slice %17 {offsets = [2, 0], sizes = [1, 32], strides = [1, 1]} : vector<4x32xf32> to vector<1x32xf32>
    %21 = vector.extract_strided_slice %17 {offsets = [3, 0], sizes = [1, 1], strides = [1, 1]} : vector<4x32xf32> to vector<1x1xf32>
    %22 = vector.shape_cast %6 : vector<8x32xf32> to vector<8x1x32xf32>
    %23 = vector.shape_cast %12 : vector<8x32xf32> to vector<1x8x32xf32>
    %24 = vector.broadcast %22 : vector<8x1x32xf32> to vector<8x8x32xf32>
    %25 = vector.broadcast %23 : vector<1x8x32xf32> to vector<8x8x32xf32>
    %26 = arith.mulf %24, %25 : vector<8x8x32xf32>
    %27 = vector.shape_cast %8 : vector<8x32xf32> to vector<8x1x32xf32>
    %28 = vector.shape_cast %14 : vector<8x32xf32> to vector<1x8x32xf32>
    %29 = vector.broadcast %27 : vector<8x1x32xf32> to vector<8x8x32xf32>
    %30 = vector.broadcast %28 : vector<1x8x32xf32> to vector<8x8x32xf32>
    %31 = arith.mulf %29, %30 : vector<8x8x32xf32>
    %32 = arith.addf %26, %31 : vector<8x8x32xf32>
    %33 = vector.shape_cast %32 : vector<8x8x32xf32> to vector<64x32xf32>
    %34 = arith.truncf %33 : vector<64x32xf32> to vector<64x32xbf16>
    %c0_23 = arith.constant 0 : index
    %c0_24 = arith.constant 0 : index
    %35 = vector.load %arg12[%c0_23, %c0_24] : memref<32x32xbf16, #tpu.memory_space<vmem>>, vector<32x32xbf16>
    %cst = arith.constant dense<0.000000e+00> : vector<64x32xf32>
    %36 = tpu.matmul %34, %35, %cst {dimension_numbers = #tpu.dot_dimension_numbers<[1], [0], [0], [1], [0, 0, 1, 1], [], []>} : vector<64x32xbf16>, vector<32x32xbf16>, vector<64x32xf32> -> vector<64x32xf32>
    %37 = vector.shape_cast %36 : vector<64x32xf32> to vector<8x8x32xf32>
    %38 = vector.shape_cast %4 : vector<8x32xf32> to vector<8x1x32xf32>
    %39 = vector.broadcast %38 : vector<8x1x32xf32> to vector<8x8x32xf32>
    %40 = arith.addf %37, %39 : vector<8x8x32xf32>
    %41 = vector.shape_cast %10 : vector<8x32xf32> to vector<1x8x32xf32>
    %42 = vector.broadcast %41 : vector<1x8x32xf32> to vector<8x8x32xf32>
    %43 = arith.addf %40, %42 : vector<8x8x32xf32>
    %cst_25 = arith.constant 0.000000e+00 : f32
    %44 = vector.broadcast %cst_25 : f32 to vector<8x8x32xf32>
    %45 = arith.subf %44, %43 : vector<8x8x32xf32>
    %46 = math.exp %45 : vector<8x8x32xf32>
    %cst_26 = arith.constant 1.000000e+00 : f32
    %47 = vector.broadcast %cst_26 : f32 to vector<8x8x32xf32>
    %48 = arith.addf %47, %46 : vector<8x8x32xf32>
    %49 = tpu.reciprocal %48 {approx = true} : vector<8x8x32xf32> -> vector<8x8x32xf32>
    %50 = arith.mulf %43, %49 : vector<8x8x32xf32>
    %51 = vector.shape_cast %50 : vector<8x8x32xf32> to vector<64x32xf32>
    %52 = arith.truncf %51 : vector<64x32xf32> to vector<64x32xbf16>
    %c0_27 = arith.constant 0 : index
    %c0_28 = arith.constant 0 : index
    %53 = vector.load %arg13[%c0_27, %c0_28] : memref<32x32xbf16, #tpu.memory_space<vmem>>, vector<32x32xbf16>
    %cst_29 = arith.constant dense<0.000000e+00> : vector<64x32xf32>
    %54 = tpu.matmul %52, %53, %cst_29 {dimension_numbers = #tpu.dot_dimension_numbers<[1], [0], [0], [1], [0, 0, 1, 1], [], []>} : vector<64x32xbf16>, vector<32x32xbf16>, vector<64x32xf32> -> vector<64x32xf32>
    %55 = vector.broadcast %18 : vector<1x32xf32> to vector<64x32xf32>
    %56 = arith.addf %54, %55 : vector<64x32xf32>
    %cst_30 = arith.constant 0.000000e+00 : f32
    %57 = vector.broadcast %cst_30 : f32 to vector<64x32xf32>
    %58 = arith.subf %57, %56 : vector<64x32xf32>
    %59 = math.exp %58 : vector<64x32xf32>
    %cst_31 = arith.constant 1.000000e+00 : f32
    %60 = vector.broadcast %cst_31 : f32 to vector<64x32xf32>
    %61 = arith.addf %60, %59 : vector<64x32xf32>
    %62 = tpu.reciprocal %61 {approx = true} : vector<64x32xf32> -> vector<64x32xf32>
    %63 = arith.mulf %56, %62 : vector<64x32xf32>
    %c0_32 = arith.constant 0 : index
    %c0_33 = arith.constant 0 : index
    %64 = vector.load %arg21[%c0_32, %c0_33] : memref<8x32xf32, #tpu.memory_space<vmem>>, vector<8x32xf32>
    %65 = vector.shape_cast %63 : vector<64x32xf32> to vector<8x8x32xf32>
    %cst_34 = arith.constant dense<0.000000e+00> : vector<8x32xf32>
    %66 = vector.multi_reduction <add>, %65, %cst_34 [1] : vector<8x8x32xf32> to vector<8x32xf32>
    %67 = arith.addf %64, %66 : vector<8x32xf32>
    %c0_35 = arith.constant 0 : index
    %c0_36 = arith.constant 0 : index
    %68 = vector.load %arg21[%c0_35, %c0_36] : memref<8x32xf32, #tpu.memory_space<vmem>>, vector<8x32xf32>
    tpu.vector_store %arg21[%c0_35, %c0_36], %67 {strides = array<i32>} : memref<8x32xf32, #tpu.memory_space<vmem>>, vector<8x32xf32>,
    %c0_37 = arith.constant 0 : index
    %c0_38 = arith.constant 0 : index
    %69 = vector.load %arg16[%c0_37, %c0_38] : memref<32x32xf32, #tpu.memory_space<vmem>>, vector<32x32xf32>
    %cst_39 = arith.constant dense<0.000000e+00> : vector<64x32xf32>
    %70 = tpu.matmul %63, %69, %cst_39 {dimension_numbers = #tpu.dot_dimension_numbers<[1], [0], [0], [1], [0, 0, 1, 1], [], []>} : vector<64x32xf32>, vector<32x32xf32>, vector<64x32xf32> -> vector<64x32xf32>
    %71 = vector.broadcast %19 : vector<1x32xf32> to vector<64x32xf32>
    %72 = arith.addf %70, %71 : vector<64x32xf32>
    %cst_40 = arith.constant 0.000000e+00 : f32
    %73 = vector.broadcast %cst_40 : f32 to vector<64x32xf32>
    %74 = arith.subf %73, %72 : vector<64x32xf32>
    %75 = math.exp %74 : vector<64x32xf32>
    %cst_41 = arith.constant 1.000000e+00 : f32
    %76 = vector.broadcast %cst_41 : f32 to vector<64x32xf32>
    %77 = arith.addf %76, %75 : vector<64x32xf32>
    %78 = tpu.reciprocal %77 {approx = true} : vector<64x32xf32> -> vector<64x32xf32>
    %79 = arith.mulf %72, %78 : vector<64x32xf32>
    %80 = vector.shape_cast %79 : vector<64x32xf32> to vector<8x8x32xf32>
    %81 = vector.shape_cast %20 : vector<1x32xf32> to vector<1x1x32xf32>
    %82 = vector.broadcast %81 : vector<1x1x32xf32> to vector<8x8x32xf32>
    %83 = arith.mulf %80, %82 : vector<8x8x32xf32>
    %cst_42 = arith.constant dense<0.000000e+00> : vector<8x8xf32>
    %84 = vector.multi_reduction <add>, %83, %cst_42 [2] : vector<8x8x32xf32> to vector<8x8xf32>
    %85 = vector.shape_cast %84 : vector<8x8xf32> to vector<8x8x1xf32>
    %86 = vector.shape_cast %21 : vector<1x1xf32> to vector<1x1x1xf32>
    %87 = vector.broadcast %86 : vector<1x1x1xf32> to vector<8x8x1xf32>
    %88 = arith.addf %85, %87 : vector<8x8x1xf32>
    %c0_43 = arith.constant 0 : index
    %c0_44 = arith.constant 0 : index
    %89 = vector.load %arg22[%c0_43, %c0_44] : memref<8x1xf32, #tpu.memory_space<vmem>>, vector<8x1xf32>
    %cst_45 = arith.constant dense<0.000000e+00> : vector<8x1xf32>
    %90 = vector.multi_reduction <add>, %88, %cst_45 [1] : vector<8x8x1xf32> to vector<8x1xf32>
    %91 = arith.addf %89, %90 : vector<8x1xf32>
    %c0_46 = arith.constant 0 : index
    %c0_47 = arith.constant 0 : index
    %92 = vector.load %arg22[%c0_46, %c0_47] : memref<8x1xf32, #tpu.memory_space<vmem>>, vector<8x1xf32>
    tpu.vector_store %arg22[%c0_46, %c0_47], %91 {strides = array<i32>} : memref<8x1xf32, #tpu.memory_space<vmem>>, vector<8x1xf32>,
    %c0_48 = arith.constant 0 : index
    %c0_49 = arith.constant 0 : index
    %93 = vector.load %arg23[%c0_48, %c0_49] : memref<8x3xf32, #tpu.memory_space<vmem>>, vector<8x3xf32>
    %94 = vector.shape_cast %16 : vector<8x3xf32> to vector<1x8x3xf32>
    %95 = vector.broadcast %88 : vector<8x8x1xf32> to vector<8x8x3xf32>
    %96 = vector.broadcast %94 : vector<1x8x3xf32> to vector<8x8x3xf32>
    %97 = arith.mulf %95, %96 : vector<8x8x3xf32>
    %cst_50 = arith.constant dense<0.000000e+00> : vector<8x3xf32>
    %98 = vector.multi_reduction <add>, %97, %cst_50 [1] : vector<8x8x3xf32> to vector<8x3xf32>
    %99 = arith.addf %93, %98 : vector<8x3xf32>
    %c0_51 = arith.constant 0 : index
    %c0_52 = arith.constant 0 : index
    %100 = vector.load %arg23[%c0_51, %c0_52] : memref<8x3xf32, #tpu.memory_space<vmem>>, vector<8x3xf32>
    tpu.vector_store %arg23[%c0_51, %c0_52], %99 {strides = array<i32>} : memref<8x3xf32, #tpu.memory_space<vmem>>, vector<8x3xf32>,
    %c1_i32 = arith.constant 1 : i32
    %101 = arith.cmpi eq, %arg2, %c1_i32 : i32
    %102 = arith.extui %101 : i1 to i32
    %c0_i32_53 = arith.constant 0 : i32
    %103 = arith.cmpi ne, %102, %c0_i32_53 : i32
    scf.if %103 {
      %c0_54 = arith.constant 0 : index
      %c0_55 = arith.constant 0 : index
      %104 = vector.load %arg18[%c0_54, %c0_55] : memref<3x32xf32, #tpu.memory_space<vmem>>, vector<3x32xf32>
      %105 = vector.extract_strided_slice %104 {offsets = [0, 0], sizes = [1, 32], strides = [1, 1]} : vector<3x32xf32> to vector<1x32xf32>
      %106 = vector.extract_strided_slice %104 {offsets = [1, 0], sizes = [1, 32], strides = [1, 1]} : vector<3x32xf32> to vector<1x32xf32>
      %107 = vector.extract_strided_slice %104 {offsets = [2, 0], sizes = [1, 32], strides = [1, 1]} : vector<3x32xf32> to vector<1x32xf32>
      %c0_56 = arith.constant 0 : index
      %c0_57 = arith.constant 0 : index
      %c0_58 = arith.constant 0 : index
      %108 = vector.load %arg7[%c0_56, %c0_57, %c0_58] : memref<1x8x32xf32, #tpu.memory_space<vmem>>, vector<1x8x32xf32>
      %109 = vector.shape_cast %108 : vector<1x8x32xf32> to vector<8x32xf32>
      %c0_59 = arith.constant 0 : index
      %c0_60 = arith.constant 0 : index
      %c0_61 = arith.constant 0 : index
      %110 = vector.load %arg6[%c0_59, %c0_60, %c0_61] : memref<1x8x3xf32, #tpu.memory_space<vmem>>, vector<1x8x3xf32>
      %111 = vector.shape_cast %110 : vector<1x8x3xf32> to vector<8x3xf32>
      %c0_62 = arith.constant 0 : index
      %c0_63 = arith.constant 0 : index
      %112 = vector.load %arg21[%c0_62, %c0_63] : memref<8x32xf32, #tpu.memory_space<vmem>>, vector<8x32xf32>
      %c0_64 = arith.constant 0 : index
      %c0_65 = arith.constant 0 : index
      %113 = vector.load %arg14[%c0_64, %c0_65] : memref<32x32xf32, #tpu.memory_space<vmem>>, vector<32x32xf32>
      %cst_66 = arith.constant dense<0.000000e+00> : vector<8x32xf32>
      %114 = tpu.matmul %112, %113, %cst_66 {dimension_numbers = #tpu.dot_dimension_numbers<[1], [0], [0], [1], [0, 0, 1, 1], [], []>} : vector<8x32xf32>, vector<32x32xf32>, vector<8x32xf32> -> vector<8x32xf32>
      %115 = arith.addf %109, %114 : vector<8x32xf32>
      %cst_67 = arith.constant 0.000000e+00 : f32
      %116 = vector.broadcast %cst_67 : f32 to vector<8x32xf32>
      %117 = arith.subf %116, %115 : vector<8x32xf32>
      %118 = math.exp %117 : vector<8x32xf32>
      %cst_68 = arith.constant 1.000000e+00 : f32
      %119 = vector.broadcast %cst_68 : f32 to vector<8x32xf32>
      %120 = arith.addf %119, %118 : vector<8x32xf32>
      %121 = tpu.reciprocal %120 {approx = true} : vector<8x32xf32> -> vector<8x32xf32>
      %122 = arith.mulf %115, %121 : vector<8x32xf32>
      %c0_69 = arith.constant 0 : index
      %c0_70 = arith.constant 0 : index
      %123 = vector.load %arg15[%c0_69, %c0_70] : memref<32x32xf32, #tpu.memory_space<vmem>>, vector<32x32xf32>
      %cst_71 = arith.constant dense<0.000000e+00> : vector<8x32xf32>
      %124 = tpu.matmul %122, %123, %cst_71 {dimension_numbers = #tpu.dot_dimension_numbers<[1], [0], [0], [1], [0, 0, 1, 1], [], []>} : vector<8x32xf32>, vector<32x32xf32>, vector<8x32xf32> -> vector<8x32xf32>
      %125 = vector.broadcast %105 : vector<1x32xf32> to vector<8x32xf32>
      %126 = arith.addf %124, %125 : vector<8x32xf32>
      %cst_72 = arith.constant dense<0.000000e+00> : vector<8xf32>
      %127 = vector.multi_reduction <add>, %126, %cst_72 [1] : vector<8x32xf32> to vector<8xf32>
      %128 = vector.shape_cast %127 : vector<8xf32> to vector<8x1xf32>
      %cst_73 = arith.constant 3.200000e+01 : f32
      %129 = vector.broadcast %cst_73 : f32 to vector<8x1xf32>
      %130 = arith.divf %128, %129 : vector<8x1xf32>
      %131 = vector.broadcast %130 : vector<8x1xf32> to vector<8x32xf32>
      %132 = arith.subf %126, %131 : vector<8x32xf32>
      %133 = arith.mulf %132, %132 : vector<8x32xf32>
      %cst_74 = arith.constant dense<0.000000e+00> : vector<8xf32>
      %134 = vector.multi_reduction <add>, %133, %cst_74 [1] : vector<8x32xf32> to vector<8xf32>
      %135 = vector.shape_cast %134 : vector<8xf32> to vector<8x1xf32>
      %cst_75 = arith.constant 3.200000e+01 : f32
      %136 = vector.broadcast %cst_75 : f32 to vector<8x1xf32>
      %137 = arith.divf %135, %136 : vector<8x1xf32>
      %138 = vector.broadcast %130 : vector<8x1xf32> to vector<8x32xf32>
      %139 = arith.subf %126, %138 : vector<8x32xf32>
      %cst_76 = arith.constant 9.99999974E-6 : f32
      %140 = vector.broadcast %cst_76 : f32 to vector<8x1xf32>
      %141 = arith.addf %137, %140 : vector<8x1xf32>
      %142 = math.rsqrt %141 : vector<8x1xf32>
      %143 = vector.broadcast %142 : vector<8x1xf32> to vector<8x32xf32>
      %144 = arith.mulf %139, %143 : vector<8x32xf32>
      %145 = vector.broadcast %106 : vector<1x32xf32> to vector<8x32xf32>
      %146 = arith.mulf %144, %145 : vector<8x32xf32>
      %147 = vector.broadcast %107 : vector<1x32xf32> to vector<8x32xf32>
      %148 = arith.addf %146, %147 : vector<8x32xf32>
      %149 = vector.shape_cast %148 : vector<8x32xf32> to vector<1x8x32xf32>
      %c0_77 = arith.constant 0 : index
      %c0_78 = arith.constant 0 : index
      %c0_79 = arith.constant 0 : index
      %150 = vector.load %arg19[%c0_77, %c0_78, %c0_79] : memref<1x8x32xf32, #tpu.memory_space<vmem>>, vector<1x8x32xf32>
      tpu.vector_store %arg19[%c0_77, %c0_78, %c0_79], %149 {strides = array<i32>} : memref<1x8x32xf32, #tpu.memory_space<vmem>>, vector<1x8x32xf32>,
      %c0_80 = arith.constant 0 : index
      %c0_81 = arith.constant 0 : index
      %151 = vector.load %arg22[%c0_80, %c0_81] : memref<8x1xf32, #tpu.memory_space<vmem>>, vector<8x1xf32>
      %152 = vector.broadcast %151 : vector<8x1xf32> to vector<8x3xf32>
      %153 = arith.mulf %111, %152 : vector<8x3xf32>
      %c0_82 = arith.constant 0 : index
      %c0_83 = arith.constant 0 : index
      %154 = vector.load %arg23[%c0_82, %c0_83] : memref<8x3xf32, #tpu.memory_space<vmem>>, vector<8x3xf32>
      %155 = arith.subf %153, %154 : vector<8x3xf32>
      %156 = vector.shape_cast %155 : vector<8x3xf32> to vector<1x8x3xf32>
      %c0_84 = arith.constant 0 : index
      %c0_85 = arith.constant 0 : index
      %c0_86 = arith.constant 0 : index
      %157 = vector.load %arg20[%c0_84, %c0_85, %c0_86] : memref<1x8x3xf32, #tpu.memory_space<vmem>>, vector<1x8x3xf32>
      tpu.vector_store %arg20[%c0_84, %c0_85, %c0_86], %156 {strides = array<i32>} : memref<1x8x3xf32, #tpu.memory_space<vmem>>, vector<1x8x3xf32>,
    } else {
    }
    return
  }
  func.func @transform_0(%arg0: i32, %arg1: i32, %arg2: i32) -> (i32, i32, i32) {
    %c0_i32 = arith.constant 0 : i32
    %c0_i32_0 = arith.constant 0 : i32
    return %arg0, %arg1, %c0_i32 : i32, i32, i32
  }
  func.func @transform_1(%arg0: i32, %arg1: i32, %arg2: i32) -> (i32, i32, i32) {
    %c0_i32 = arith.constant 0 : i32
    %c0_i32_0 = arith.constant 0 : i32
    return %arg0, %arg1, %c0_i32 : i32, i32, i32
  }
  func.func @transform_2(%arg0: i32, %arg1: i32, %arg2: i32) -> (i32, i32, i32) {
    %c0_i32 = arith.constant 0 : i32
    %c0_i32_0 = arith.constant 0 : i32
    return %arg0, %arg1, %c0_i32 : i32, i32, i32
  }
  func.func @transform_3(%arg0: i32, %arg1: i32, %arg2: i32) -> (i32, i32, i32) {
    %c0_i32 = arith.constant 0 : i32
    %c0_i32_0 = arith.constant 0 : i32
    return %arg0, %arg1, %c0_i32 : i32, i32, i32
  }
  func.func @transform_4(%arg0: i32, %arg1: i32, %arg2: i32) -> (i32, i32, i32) {
    %c0_i32 = arith.constant 0 : i32
    %c0_i32_0 = arith.constant 0 : i32
    return %arg0, %arg1, %c0_i32 : i32, i32, i32
  }
  func.func @transform_5(%arg0: i32, %arg1: i32, %arg2: i32) -> (i32, i32, i32) {
    %c0_i32 = arith.constant 0 : i32
    %c0_i32_0 = arith.constant 0 : i32
    return %arg0, %arg2, %c0_i32 : i32, i32, i32
  }
  func.func @transform_6(%arg0: i32, %arg1: i32, %arg2: i32) -> (i32, i32, i32) {
    %c0_i32 = arith.constant 0 : i32
    %c0_i32_0 = arith.constant 0 : i32
    return %arg0, %arg2, %c0_i32 : i32, i32, i32
  }
  func.func @transform_7(%arg0: i32, %arg1: i32, %arg2: i32) -> (i32, i32, i32) {
    %c0_i32 = arith.constant 0 : i32
    %c0_i32_0 = arith.constant 0 : i32
    return %arg0, %arg2, %c0_i32 : i32, i32, i32
  }
  func.func @transform_8(%arg0: i32, %arg1: i32, %arg2: i32) -> (i32, i32, i32) {
    %c0_i32 = arith.constant 0 : i32
    %c0_i32_0 = arith.constant 0 : i32
    return %arg0, %arg2, %c0_i32 : i32, i32, i32
  }
  func.func @transform_9(%arg0: i32, %arg1: i32, %arg2: i32) -> (i32, i32) {
    %c0_i32 = arith.constant 0 : i32
    %c0_i32_0 = arith.constant 0 : i32
    %c0_i32_1 = arith.constant 0 : i32
    return %c0_i32, %c0_i32_0 : i32, i32
  }
  func.func @transform_10(%arg0: i32, %arg1: i32, %arg2: i32) -> (i32, i32) {
    %c0_i32 = arith.constant 0 : i32
    %c0_i32_0 = arith.constant 0 : i32
    %c0_i32_1 = arith.constant 0 : i32
    return %c0_i32, %c0_i32_0 : i32, i32
  }
  func.func @transform_11(%arg0: i32, %arg1: i32, %arg2: i32) -> (i32, i32) {
    %c0_i32 = arith.constant 0 : i32
    %c0_i32_0 = arith.constant 0 : i32
    %c0_i32_1 = arith.constant 0 : i32
    return %c0_i32, %c0_i32_0 : i32, i32
  }
  func.func @transform_12(%arg0: i32, %arg1: i32, %arg2: i32) -> (i32, i32) {
    %c0_i32 = arith.constant 0 : i32
    %c0_i32_0 = arith.constant 0 : i32
    %c0_i32_1 = arith.constant 0 : i32
    return %c0_i32, %c0_i32_0 : i32, i32
  }
  func.func @transform_13(%arg0: i32, %arg1: i32, %arg2: i32) -> (i32, i32) {
    %c0_i32 = arith.constant 0 : i32
    %c0_i32_0 = arith.constant 0 : i32
    %c0_i32_1 = arith.constant 0 : i32
    return %c0_i32, %c0_i32_0 : i32, i32
  }
  func.func @transform_14(%arg0: i32, %arg1: i32, %arg2: i32) -> (i32, i32) {
    %c0_i32 = arith.constant 0 : i32
    %c0_i32_0 = arith.constant 0 : i32
    %c0_i32_1 = arith.constant 0 : i32
    return %c0_i32, %c0_i32_0 : i32, i32
  }
  func.func @transform_15(%arg0: i32, %arg1: i32, %arg2: i32) -> (i32, i32) {
    %c0_i32 = arith.constant 0 : i32
    %c0_i32_0 = arith.constant 0 : i32
    %c0_i32_1 = arith.constant 0 : i32
    return %c0_i32, %c0_i32_0 : i32, i32
  }
  func.func @transform_16(%arg0: i32, %arg1: i32, %arg2: i32) -> (i32, i32, i32) {
    %c0_i32 = arith.constant 0 : i32
    %c0_i32_0 = arith.constant 0 : i32
    return %arg0, %arg1, %c0_i32 : i32, i32, i32
  }
  func.func @transform_17(%arg0: i32, %arg1: i32, %arg2: i32) -> (i32, i32, i32) {
    %c0_i32 = arith.constant 0 : i32
    %c0_i32_0 = arith.constant 0 : i32
    return %arg0, %arg1, %c0_i32 : i32, i32, i32
  }
}

</mosaic_0001>

<llo_original>
// kernel: tpu_custom_call.1
$region0: #{tpu_custom_call.1}
  #allocation0 [shape = 'u32[]', space=smem, size = 0x4, offset = 0x4, fixed_abs, tag = 'smem constant byte address 0x4 - core index']
  #allocation1 [shape = 'u32[144,128]{1,0:T(1,128)}', space=vmem, size = 0x12000, scoped, tag = 'internal scratch']
  #allocation2 [shape = 'f32[8,32]{1,0:T(8,128)}', space=vmem, size = 0x1000, scoped, tag = 'scratch operand']
  #allocation3 [shape = 'f32[8,1]{1,0:T(8,128)}', space=vmem, size = 0x1000, scoped, tag = 'scratch operand']
  #allocation4 [shape = 'f32[8,3]{1,0:T(8,128)}', space=vmem, size = 0x1000, scoped, tag = 'scratch operand']
  %s0 = inlined_call_operand.vmem [shape: f32[2,16,32], index: 0, kind: input, shape index: {}]
  %s1 = inlined_call_operand.vmem [shape: f32[2,16,32], index: 1, kind: input, shape index: {}]
  %s2 = inlined_call_operand.hbm [shape: f32[2,16,32], index: 2, kind: input, shape index: {}]
  %s3 = inlined_call_operand.vmem [shape: f32[2,16,3], index: 3, kind: input, shape index: {}]
  %s4 = inlined_call_operand.hbm [shape: f32[2,16,32], index: 4, kind: input, shape index: {}]
  %s5 = inlined_call_operand.hbm [shape: f32[2,16,32], index: 5, kind: input, shape index: {}]
  %s6 = inlined_call_operand.vmem [shape: f32[2,16,32], index: 6, kind: input, shape index: {}]
  %s7 = inlined_call_operand.hbm [shape: f32[2,16,32], index: 7, kind: input, shape index: {}]
  %s8 = inlined_call_operand.vmem [shape: f32[2,16,3], index: 8, kind: input, shape index: {}]
  %s9 = inlined_call_operand.hbm [shape: bf16[32,32], index: 9, kind: input, shape index: {}]
  %s10 = inlined_call_operand.vmem [shape: bf16[32,32], index: 10, kind: input, shape index: {}]
  %s11 = inlined_call_operand.hbm [shape: f32[32,32], index: 11, kind: input, shape index: {}]
  %s12 = inlined_call_operand.hbm [shape: f32[32,32], index: 12, kind: input, shape index: {}]
  %s13 = inlined_call_operand.hbm [shape: f32[32,32], index: 13, kind: input, shape index: {}]
  %s14 = inlined_call_operand.vmem [shape: f32[4,32], index: 14, kind: input, shape index: {}]
  %s15 = inlined_call_operand.vmem [shape: f32[3,32], index: 15, kind: input, shape index: {}]
  %s16 = inlined_call_operand.hbm [shape: f32[2,16,32], index: 16, kind: output, shape index: {0}]
  %s17 = inlined_call_operand.vmem [shape: f32[2,16,3], index: 17, kind: output, shape index: {1}]
  %18 = xla_tuple %s16, %s17
  %s19 = sld [smem:[#allocation0]]
  $region145: #{tpu_custom_call.1} parent=0
    _
  %s21 = ssub.s32 1, %s19
  %s22 = scalar_select 0, %s21, %s19
  $region1: #{tpu_custom_call.1} parent=0
    #allocation5 [shape = 'u8[8192]{0}', space=vmem, size = 0x2000, scoped, tag = 'input window, operand 2']
    #allocation6 [shape = 's32[2]{0}', space=sflag, size = 0x8, scoped, tag = 'scoped memory for tpu_custom_call.1']
    #allocation7 [shape = 's32[2]{0}', space=sflag, size = 0x8, scoped, tag = 'scoped memory for tpu_custom_call.1']
    #allocation8 [shape = 'u8[8192]{0}', space=vmem, size = 0x2000, scoped, tag = 'input window, operand 4']
    #allocation9 [shape = 's32[2]{0}', space=sflag, size = 0x8, scoped, tag = 'scoped memory for tpu_custom_call.1']
    #allocation10 [shape = 'u8[8192]{0}', space=vmem, size = 0x2000, scoped, tag = 'input window, operand 5']
    #allocation11 [shape = 'u8[8192]{0}', space=vmem, size = 0x2000, scoped, tag = 'input window, operand 7']
    #allocation12 [shape = 's32[2]{0}', space=sflag, size = 0x8, scoped, tag = 'scoped memory for tpu_custom_call.1']
    #allocation13 [shape = 'u8[8192]{0}', space=vmem, size = 0x2000, scoped, tag = 'input window, operand 9, single buffered']
    #allocation14 [shape = 'u8[16384]{0}', space=vmem, size = 0x4000, scoped, tag = 'input window, operand 11, single buffered']
    #allocation15 [shape = 's32[1]{0}', space=sflag, size = 0x4, scoped, tag = 'scoped memory for tpu_custom_call.1']
    #allocation16 [shape = 'u8[16384]{0}', space=vmem, size = 0x4000, scoped, tag = 'input window, operand 12, single buffered']
    #allocation17 [shape = 'u8[16384]{0}', space=vmem, size = 0x4000, scoped, tag = 'input window, operand 13, single buffered']
    #allocation18 [shape = 's32[1]{0}', space=sflag, size = 0x4, scoped, tag = 'scoped memory for tpu_custom_call.1']
    #allocation19 [shape = 'u8[8192]{0}', space=vmem, size = 0x2000, scoped, tag = 'output window, operand 0']
    %23 = vsyncpa [#allocation6], 0
    %s24 = scalar_lea.sflag [#allocation6], 1
    %25 = vsyncpa %s24, 0
    %26 = vsyncpa [#allocation9], 0
    %s27 = scalar_lea.sflag [#allocation9], 1
    %28 = vsyncpa %s27, 0
    %29 = vsyncpa [#allocation12], 0
    %s30 = scalar_lea.sflag [#allocation12], 1
    %31 = vsyncpa %s30, 0
    %32 = vsyncpa [#allocation15], 0
    %33 = vsyncpa [#allocation18], 0
    %34 = vsyncpa [#allocation7], 0
    %s35 = scalar_lea.sflag [#allocation7], 1
    %36 = vsyncpa %s35, 0
    loop: start=0, step=1, limit=10
    $region2: #{tpu_custom_call.1} parent=1 // loop_pre_header
      _
    $region3: #{tpu_custom_call.1} parent=1 // loop_header
      %s38 = sphi 0, %s42
      %p39 = scmp.ge.s32.totalorder %s38, 10
      %s45 = sphi 0, %s64
      %s46 = sphi 0, %s60
      %s47 = sphi 0, %s56
      %s48 = sphi 0, %s45
      %s49 = sphi 0, %s46
      %s50 = sphi 0, %s47
      %s51 = sphi 0, %s48
      %s52 = sphi 0, %s49
      %s53 = sphi 0, %s50
      %s69 = sphi 0, %s71
      %s72 = sphi 0, %s69
      %s73 = sphi 0, %s72
      %s89 = sphi 0, %s73
      %s97 = sphi 0, %s99
      %s100 = sphi 0, %s97
      %s101 = sphi 0, %s100
      %s117 = sphi 0, %s101
      %s125 = sphi 0, %s127
      %s128 = sphi 0, %s125
      %s129 = sphi 0, %s128
      %s145 = sphi 0, %s129
      %s153 = sphi 0, %s155
      %s156 = sphi 0, %s153
      %s157 = sphi 0, %s156
      %s173 = sphi 0, %s157
      %s181 = sphi 0, %s183
      %s184 = sphi 0, %s181
      %s185 = sphi 0, %s184
      %s201 = sphi 0, %s185
      %s209 = sphi 0, %s211
      %s212 = sphi 0, %s209
      %s213 = sphi 0, %s212
      %s229 = sphi 0, %s213
      %s237 = sphi 0, %s239
      %s240 = sphi 0, %s237
      %s241 = sphi 0, %s240
      %s257 = sphi 0, %s241
      %s265 = sphi 0, %s267
      %s268 = sphi 0, %s265
      %s269 = sphi 0, %s268
      %s285 = sphi 0, %s269
      %s293 = sphi 0, %s295
      %s296 = sphi 0, %s293
      %s297 = sphi 0, %s296
      %s313 = sphi 0, %s297
      %s317 = sphi 0, %s317
      %s319 = sphi 0, %s317
      %s320 = sphi 0, %s319
      %s334 = sphi 0, %s320
      %s338 = sphi 0, %s338
      %s340 = sphi 0, %s338
      %s341 = sphi 0, %s340
      %s355 = sphi 0, %s341
      %s359 = sphi 0, %s359
      %s361 = sphi 0, %s359
      %s362 = sphi 0, %s361
      %s376 = sphi 0, %s362
      %s380 = sphi 0, %s380
      %s382 = sphi 0, %s380
      %s383 = sphi 0, %s382
      %s397 = sphi 0, %s383
      %s401 = sphi 0, %s401
      %s403 = sphi 0, %s401
      %s404 = sphi 0, %s403
      %s418 = sphi 0, %s404
      %s422 = sphi 0, %s422
      %s424 = sphi 0, %s422
      %s425 = sphi 0, %s424
      %s439 = sphi 0, %s425
      %s443 = sphi 0, %s443
      %s445 = sphi 0, %s443
      %s446 = sphi 0, %s445
      %s460 = sphi 0, %s446
      %s468 = sphi 0, %s470
      %s471 = sphi 0, %s468
      %s472 = sphi 0, %s471
      %s488 = sphi 0, %s472
      %s496 = sphi 0, %s498
      %s499 = sphi 0, %s496
      %s500 = sphi 0, %s499
      %s516 = sphi 0, %s500
    $region4: #{tpu_custom_call.1} parent=1 // loop_header_branch
      %41 = sbr.rel (%p39) target = $region8
    $region5: #{tpu_custom_call.1} parent=1 // loop_body
      %s43 = ssub.s32 %s38, 1
      %s44 = ssub.s32 %s38, 2
      %s54 = sadd.s32 1, %s47
      %p55 = scmp.ge.s32.totalorder %s54, 2
      %s56 = scalar_select %p55, 0, %s54
      %s57 = sadd.s32 1, %s46
      %s58 = scalar_select %p55, %s57, %s46
      %p59 = scmp.ge.s32.totalorder %s58, 2
      %s60 = scalar_select %p59, 0, %s58
      %s61 = sadd.s32 1, %s45
      %s62 = scalar_select %p59, %s61, %s45
      %p63 = scmp.ge.s32.totalorder %s62, 2
      %s64 = scalar_select %p63, 0, %s62
      %s65 = ssub.s32 %s45, %s64
      %s66 = ssub.s32 %s46, %s60
      %s67 = sor.u32 %s65, %s66
      %p68 = scmp.eq.s32.totalorder %s67, 0
      %s70 = sadd.s32 %s69, 1
      %s71 = scalar_select %p68, %s69, %s70
      %p74 = pneg %p68
      %p75 = scmp.eq.s32.totalorder %s38, 7
      %p76 = por %p74, %p75
      %p77 = scmp.ne.s32.totalorder %s69, %s72
      %p78 = scmp.eq.s32.totalorder %s38, 0
      %p79 = por %p77, %p78
      %p80 = scmp.ne.s32.totalorder %s69, %s72
      %p81 = scmp.eq.s32.totalorder %s43, 7
      %p82 = por %p80, %p81
      %p83 = scmp.ne.s32.totalorder %s72, %s73
      %p84 = scmp.eq.s32.totalorder %s43, 0
      %p85 = por %p83, %p84
      %p86 = scmp.ne.s32.totalorder %s72, %s73
      %p87 = scmp.eq.s32.totalorder %s44, 7
      %p88 = por %p86, %p87
      %p90 = scmp.ne.s32.totalorder %s73, %s89
      %p91 = scmp.eq.s32.totalorder %s44, 0
      %p92 = por %p90, %p91
      %s93 = ssub.s32 %s45, %s64
      %s94 = ssub.s32 %s46, %s60
      %s95 = sor.u32 %s93, %s94
      %p96 = scmp.eq.s32.totalorder %s95, 0
      %s98 = sadd.s32 %s97, 1
      %s99 = scalar_select %p96, %s97, %s98
      %p102 = pneg %p96
      %p103 = scmp.eq.s32.totalorder %s38, 7
      %p104 = por %p102, %p103
      %p105 = scmp.ne.s32.totalorder %s97, %s100
      %p106 = scmp.eq.s32.totalorder %s38, 0
      %p107 = por %p105, %p106
      %p108 = scmp.ne.s32.totalorder %s97, %s100
      %p109 = scmp.eq.s32.totalorder %s43, 7
      %p110 = por %p108, %p109
      %p111 = scmp.ne.s32.totalorder %s100, %s101
      %p112 = scmp.eq.s32.totalorder %s43, 0
      %p113 = por %p111, %p112
      %p114 = scmp.ne.s32.totalorder %s100, %s101
      %p115 = scmp.eq.s32.totalorder %s44, 7
      %p116 = por %p114, %p115
      %p118 = scmp.ne.s32.totalorder %s101, %s117
      %p119 = scmp.eq.s32.totalorder %s44, 0
      %p120 = por %p118, %p119
      %s121 = ssub.s32 %s45, %s64
      %s122 = ssub.s32 %s46, %s60
      %s123 = sor.u32 %s121, %s122
      %p124 = scmp.eq.s32.totalorder %s123, 0
      %s126 = sadd.s32 %s125, 1
      %s127 = scalar_select %p124, %s125, %s126
      %p130 = pneg %p124
      %p131 = scmp.eq.s32.totalorder %s38, 7
      %p132 = por %p130, %p131
      %p133 = scmp.ne.s32.totalorder %s125, %s128
      %p134 = scmp.eq.s32.totalorder %s38, 0
      %p135 = por %p133, %p134
      %p136 = scmp.ne.s32.totalorder %s125, %s128
      %p137 = scmp.eq.s32.totalorder %s43, 7
      %p138 = por %p136, %p137
      %p139 = scmp.ne.s32.totalorder %s128, %s129
      %p140 = scmp.eq.s32.totalorder %s43, 0
      %p141 = por %p139, %p140
      %p142 = scmp.ne.s32.totalorder %s128, %s129
      %p143 = scmp.eq.s32.totalorder %s44, 7
      %p144 = por %p142, %p143
      %p146 = scmp.ne.s32.totalorder %s129, %s145
      %p147 = scmp.eq.s32.totalorder %s44, 0
      %p148 = por %p146, %p147
      %s149 = ssub.s32 %s45, %s64
      %s150 = ssub.s32 %s46, %s60
      %s151 = sor.u32 %s149, %s150
      %p152 = scmp.eq.s32.totalorder %s151, 0
      %s154 = sadd.s32 %s153, 1
      %s155 = scalar_select %p152, %s153, %s154
      %p158 = pneg %p152
      %p159 = scmp.eq.s32.totalorder %s38, 7
      %p160 = por %p158, %p159
      %p161 = scmp.ne.s32.totalorder %s153, %s156
      %p162 = scmp.eq.s32.totalorder %s38, 0
      %p163 = por %p161, %p162
      %p164 = scmp.ne.s32.totalorder %s153, %s156
      %p165 = scmp.eq.s32.totalorder %s43, 7
      %p166 = por %p164, %p165
      %p167 = scmp.ne.s32.totalorder %s156, %s157
      %p168 = scmp.eq.s32.totalorder %s43, 0
      %p169 = por %p167, %p168
      %p170 = scmp.ne.s32.totalorder %s156, %s157
      %p171 = scmp.eq.s32.totalorder %s44, 7
      %p172 = por %p170, %p171
      %p174 = scmp.ne.s32.totalorder %s157, %s173
      %p175 = scmp.eq.s32.totalorder %s44, 0
      %p176 = por %p174, %p175
      %s177 = ssub.s32 %s45, %s64
      %s178 = ssub.s32 %s46, %s60
      %s179 = sor.u32 %s177, %s178
      %p180 = scmp.eq.s32.totalorder %s179, 0
      %s182 = sadd.s32 %s181, 1
      %s183 = scalar_select %p180, %s181, %s182
      %p186 = pneg %p180
      %p187 = scmp.eq.s32.totalorder %s38, 7
      %p188 = por %p186, %p187
      %p189 = scmp.ne.s32.totalorder %s181, %s184
      %p190 = scmp.eq.s32.totalorder %s38, 0
      %p191 = por %p189, %p190
      %p192 = scmp.ne.s32.totalorder %s181, %s184
      %p193 = scmp.eq.s32.totalorder %s43, 7
      %p194 = por %p192, %p193
      %p195 = scmp.ne.s32.totalorder %s184, %s185
      %p196 = scmp.eq.s32.totalorder %s43, 0
      %p197 = por %p195, %p196
      %p198 = scmp.ne.s32.totalorder %s184, %s185
      %p199 = scmp.eq.s32.totalorder %s44, 7
      %p200 = por %p198, %p199
      %p202 = scmp.ne.s32.totalorder %s185, %s201
      %p203 = scmp.eq.s32.totalorder %s44, 0
      %p204 = por %p202, %p203
      %s205 = ssub.s32 %s45, %s64
      %s206 = ssub.s32 %s47, %s56
      %s207 = sor.u32 %s205, %s206
      %p208 = scmp.eq.s32.totalorder %s207, 0
      %s210 = sadd.s32 %s209, 1
      %s211 = scalar_select %p208, %s209, %s210
      %p214 = pneg %p208
      %p215 = scmp.eq.s32.totalorder %s38, 7
      %p216 = por %p214, %p215
      %p217 = scmp.ne.s32.totalorder %s209, %s212
      %p218 = scmp.eq.s32.totalorder %s38, 0
      %p219 = por %p217, %p218
      %p220 = scmp.ne.s32.totalorder %s209, %s212
      %p221 = scmp.eq.s32.totalorder %s43, 7
      %p222 = por %p220, %p221
      %p223 = scmp.ne.s32.totalorder %s212, %s213
      %p224 = scmp.eq.s32.totalorder %s43, 0
      %p225 = por %p223, %p224
      %p226 = scmp.ne.s32.totalorder %s212, %s213
      %p227 = scmp.eq.s32.totalorder %s44, 7
      %p228 = por %p226, %p227
      %p230 = scmp.ne.s32.totalorder %s213, %s229
      %p231 = scmp.eq.s32.totalorder %s44, 0
      %p232 = por %p230, %p231
      %s233 = ssub.s32 %s45, %s64
      %s234 = ssub.s32 %s47, %s56
      %s235 = sor.u32 %s233, %s234
      %p236 = scmp.eq.s32.totalorder %s235, 0
      %s238 = sadd.s32 %s237, 1
      %s239 = scalar_select %p236, %s237, %s238
      %p242 = pneg %p236
      %p243 = scmp.eq.s32.totalorder %s38, 7
      %p244 = por %p242, %p243
      %p245 = scmp.ne.s32.totalorder %s237, %s240
      %p246 = scmp.eq.s32.totalorder %s38, 0
      %p247 = por %p245, %p246
      %p248 = scmp.ne.s32.totalorder %s237, %s240
      %p249 = scmp.eq.s32.totalorder %s43, 7
      %p250 = por %p248, %p249
      %p251 = scmp.ne.s32.totalorder %s240, %s241
      %p252 = scmp.eq.s32.totalorder %s43, 0
      %p253 = por %p251, %p252
      %p254 = scmp.ne.s32.totalorder %s240, %s241
      %p255 = scmp.eq.s32.totalorder %s44, 7
      %p256 = por %p254, %p255
      %p258 = scmp.ne.s32.totalorder %s241, %s257
      %p259 = scmp.eq.s32.totalorder %s44, 0
      %p260 = por %p258, %p259
      %s261 = ssub.s32 %s45, %s64
      %s262 = ssub.s32 %s47, %s56
      %s263 = sor.u32 %s261, %s262
      %p264 = scmp.eq.s32.totalorder %s263, 0
      %s266 = sadd.s32 %s265, 1
      %s267 = scalar_select %p264, %s265, %s266
      %p270 = pneg %p264
      %p271 = scmp.eq.s32.totalorder %s38, 7
      %p272 = por %p270, %p271
      %p273 = scmp.ne.s32.totalorder %s265, %s268
      %p274 = scmp.eq.s32.totalorder %s38, 0
      %p275 = por %p273, %p274
      %p276 = scmp.ne.s32.totalorder %s265, %s268
      %p277 = scmp.eq.s32.totalorder %s43, 7
      %p278 = por %p276, %p277
      %p279 = scmp.ne.s32.totalorder %s268, %s269
      %p280 = scmp.eq.s32.totalorder %s43, 0
      %p281 = por %p279, %p280
      %p282 = scmp.ne.s32.totalorder %s268, %s269
      %p283 = scmp.eq.s32.totalorder %s44, 7
      %p284 = por %p282, %p283
      %p286 = scmp.ne.s32.totalorder %s269, %s285
      %p287 = scmp.eq.s32.totalorder %s44, 0
      %p288 = por %p286, %p287
      %s289 = ssub.s32 %s45, %s64
      %s290 = ssub.s32 %s47, %s56
      %s291 = sor.u32 %s289, %s290
      %p292 = scmp.eq.s32.totalorder %s291, 0
      %s294 = sadd.s32 %s293, 1
      %s295 = scalar_select %p292, %s293, %s294
      %p298 = pneg %p292
      %p299 = scmp.eq.s32.totalorder %s38, 7
      %p300 = por %p298, %p299
      %p301 = scmp.ne.s32.totalorder %s293, %s296
      %p302 = scmp.eq.s32.totalorder %s38, 0
      %p303 = por %p301, %p302
      %p304 = scmp.ne.s32.totalorder %s293, %s296
      %p305 = scmp.eq.s32.totalorder %s43, 7
      %p306 = por %p304, %p305
      %p307 = scmp.ne.s32.totalorder %s296, %s297
      %p308 = scmp.eq.s32.totalorder %s43, 0
      %p309 = por %p307, %p308
      %p310 = scmp.ne.s32.totalorder %s296, %s297
      %p311 = scmp.eq.s32.totalorder %s44, 7
      %p312 = por %p310, %p311
      %p314 = scmp.ne.s32.totalorder %s297, %s313
      %p315 = scmp.eq.s32.totalorder %s44, 0
      %p316 = por %p314, %p315
      %s318 = sadd.s32 %s317, 1
      %p321 = scmp.eq.s32.totalorder %s38, 7
      %p322 = scmp.ne.s32.totalorder %s317, %s319
      %p323 = scmp.eq.s32.totalorder %s38, 0
      %p324 = por %p322, %p323
      %p325 = scmp.ne.s32.totalorder %s317, %s319
      %p326 = scmp.eq.s32.totalorder %s43, 7
      %p327 = por %p325, %p326
      %p328 = scmp.ne.s32.totalorder %s319, %s320
      %p329 = scmp.eq.s32.totalorder %s43, 0
      %p330 = por %p328, %p329
      %p331 = scmp.ne.s32.totalorder %s319, %s320
      %p332 = scmp.eq.s32.totalorder %s44, 7
      %p333 = por %p331, %p332
      %p335 = scmp.ne.s32.totalorder %s320, %s334
      %p336 = scmp.eq.s32.totalorder %s44, 0
      %p337 = por %p335, %p336
      %s339 = sadd.s32 %s338, 1
      %p342 = scmp.eq.s32.totalorder %s38, 7
      %p343 = scmp.ne.s32.totalorder %s338, %s340
      %p344 = scmp.eq.s32.totalorder %s38, 0
      %p345 = por %p343, %p344
      %p346 = scmp.ne.s32.totalorder %s338, %s340
      %p347 = scmp.eq.s32.totalorder %s43, 7
      %p348 = por %p346, %p347
      %p349 = scmp.ne.s32.totalorder %s340, %s341
      %p350 = scmp.eq.s32.totalorder %s43, 0
      %p351 = por %p349, %p350
      %p352 = scmp.ne.s32.totalorder %s340, %s341
      %p353 = scmp.eq.s32.totalorder %s44, 7
      %p354 = por %p352, %p353
      %p356 = scmp.ne.s32.totalorder %s341, %s355
      %p357 = scmp.eq.s32.totalorder %s44, 0
      %p358 = por %p356, %p357
      %s360 = sadd.s32 %s359, 1
      %p363 = scmp.eq.s32.totalorder %s38, 7
      %p364 = scmp.ne.s32.totalorder %s359, %s361
      %p365 = scmp.eq.s32.totalorder %s38, 0
      %p366 = por %p364, %p365
      %p367 = scmp.ne.s32.totalorder %s359, %s361
      %p368 = scmp.eq.s32.totalorder %s43, 7
      %p369 = por %p367, %p368
      %p370 = scmp.ne.s32.totalorder %s361, %s362
      %p371 = scmp.eq.s32.totalorder %s43, 0
      %p372 = por %p370, %p371
      %p373 = scmp.ne.s32.totalorder %s361, %s362
      %p374 = scmp.eq.s32.totalorder %s44, 7
      %p375 = por %p373, %p374
      %p377 = scmp.ne.s32.totalorder %s362, %s376
      %p378 = scmp.eq.s32.totalorder %s44, 0
      %p379 = por %p377, %p378
      %s381 = sadd.s32 %s380, 1
      %p384 = scmp.eq.s32.totalorder %s38, 7
      %p385 = scmp.ne.s32.totalorder %s380, %s382
      %p386 = scmp.eq.s32.totalorder %s38, 0
      %p387 = por %p385, %p386
      %p388 = scmp.ne.s32.totalorder %s380, %s382
      %p389 = scmp.eq.s32.totalorder %s43, 7
      %p390 = por %p388, %p389
      %p391 = scmp.ne.s32.totalorder %s382, %s383
      %p392 = scmp.eq.s32.totalorder %s43, 0
      %p393 = por %p391, %p392
      %p394 = scmp.ne.s32.totalorder %s382, %s383
      %p395 = scmp.eq.s32.totalorder %s44, 7
      %p396 = por %p394, %p395
      %p398 = scmp.ne.s32.totalorder %s383, %s397
      %p399 = scmp.eq.s32.totalorder %s44, 0
      %p400 = por %p398, %p399
      %s402 = sadd.s32 %s401, 1
      %p405 = scmp.eq.s32.totalorder %s38, 7
      %p406 = scmp.ne.s32.totalorder %s401, %s403
      %p407 = scmp.eq.s32.totalorder %s38, 0
      %p408 = por %p406, %p407
      %p409 = scmp.ne.s32.totalorder %s401, %s403
      %p410 = scmp.eq.s32.totalorder %s43, 7
      %p411 = por %p409, %p410
      %p412 = scmp.ne.s32.totalorder %s403, %s404
      %p413 = scmp.eq.s32.totalorder %s43, 0
      %p414 = por %p412, %p413
      %p415 = scmp.ne.s32.totalorder %s403, %s404
      %p416 = scmp.eq.s32.totalorder %s44, 7
      %p417 = por %p415, %p416
      %p419 = scmp.ne.s32.totalorder %s404, %s418
      %p420 = scmp.eq.s32.totalorder %s44, 0
      %p421 = por %p419, %p420
      %s423 = sadd.s32 %s422, 1
      %p426 = scmp.eq.s32.totalorder %s38, 7
      %p427 = scmp.ne.s32.totalorder %s422, %s424
      %p428 = scmp.eq.s32.totalorder %s38, 0
      %p429 = por %p427, %p428
      %p430 = scmp.ne.s32.totalorder %s422, %s424
      %p431 = scmp.eq.s32.totalorder %s43, 7
      %p432 = por %p430, %p431
      %p433 = scmp.ne.s32.totalorder %s424, %s425
      %p434 = scmp.eq.s32.totalorder %s43, 0
      %p435 = por %p433, %p434
      %p436 = scmp.ne.s32.totalorder %s424, %s425
      %p437 = scmp.eq.s32.totalorder %s44, 7
      %p438 = por %p436, %p437
      %p440 = scmp.ne.s32.totalorder %s425, %s439
      %p441 = scmp.eq.s32.totalorder %s44, 0
      %p442 = por %p440, %p441
      %s444 = sadd.s32 %s443, 1
      %p447 = scmp.eq.s32.totalorder %s38, 7
      %p448 = scmp.ne.s32.totalorder %s443, %s445
      %p449 = scmp.eq.s32.totalorder %s38, 0
      %p450 = por %p448, %p449
      %p451 = scmp.ne.s32.totalorder %s443, %s445
      %p452 = scmp.eq.s32.totalorder %s43, 7
      %p453 = por %p451, %p452
      %p454 = scmp.ne.s32.totalorder %s445, %s446
      %p455 = scmp.eq.s32.totalorder %s43, 0
      %p456 = por %p454, %p455
      %p457 = scmp.ne.s32.totalorder %s445, %s446
      %p458 = scmp.eq.s32.totalorder %s44, 7
      %p459 = por %p457, %p458
      %p461 = scmp.ne.s32.totalorder %s446, %s460
      %p462 = scmp.eq.s32.totalorder %s44, 0
      %p463 = por %p461, %p462
      %s464 = ssub.s32 %s45, %s64
      %s465 = ssub.s32 %s46, %s60
      %s466 = sor.u32 %s464, %s465
      %p467 = scmp.eq.s32.totalorder %s466, 0
      %s469 = sadd.s32 %s468, 1
      %s470 = scalar_select %p467, %s468, %s469
      %p473 = pneg %p467
      %p474 = scmp.eq.s32.totalorder %s38, 7
      %p475 = por %p473, %p474
      %p476 = scmp.ne.s32.totalorder %s468, %s471
      %p477 = scmp.eq.s32.totalorder %s38, 0
      %p478 = por %p476, %p477
      %p479 = scmp.ne.s32.totalorder %s468, %s471
      %p480 = scmp.eq.s32.totalorder %s43, 7
      %p481 = por %p479, %p480
      %p482 = scmp.ne.s32.totalorder %s471, %s472
      %p483 = scmp.eq.s32.totalorder %s43, 0
      %p484 = por %p482, %p483
      %p485 = scmp.ne.s32.totalorder %s471, %s472
      %p486 = scmp.eq.s32.totalorder %s44, 7
      %p487 = por %p485, %p486
      %p489 = scmp.ne.s32.totalorder %s472, %s488
      %p490 = scmp.eq.s32.totalorder %s44, 0
      %p491 = por %p489, %p490
      %s492 = ssub.s32 %s45, %s64
      %s493 = ssub.s32 %s46, %s60
      %s494 = sor.u32 %s492, %s493
      %p495 = scmp.eq.s32.totalorder %s494, 0
      %s497 = sadd.s32 %s496, 1
      %s498 = scalar_select %p495, %s496, %s497
      %p501 = pneg %p495
      %p502 = scmp.eq.s32.totalorder %s38, 7
      %p503 = por %p501, %p502
      %p504 = scmp.ne.s32.totalorder %s496, %s499
      %p505 = scmp.eq.s32.totalorder %s38, 0
      %p506 = por %p504, %p505
      %p507 = scmp.ne.s32.totalorder %s496, %s499
      %p508 = scmp.eq.s32.totalorder %s43, 7
      %p509 = por %p507, %p508
      %p510 = scmp.ne.s32.totalorder %s499, %s500
      %p511 = scmp.eq.s32.totalorder %s43, 0
      %p512 = por %p510, %p511
      %p513 = scmp.ne.s32.totalorder %s499, %s500
      %p514 = scmp.eq.s32.totalorder %s44, 7
      %p515 = por %p513, %p514
      %p517 = scmp.ne.s32.totalorder %s500, %s516
      %p518 = scmp.eq.s32.totalorder %s44, 0
      %p519 = por %p517, %p518
      %p520 = scmp.le.s32.totalorder 1, %s38
      %p521 = scmp.lt.s32.totalorder %s38, 9
      %p522 = pnand %p520, %p521
      %p523 = pneg %p522
      // Predicated region
      $region9: #{tpu_custom_call.1} parent=5 // pred_check
        _
      $region10: #{tpu_custom_call.1} parent=5 // pred_check_branch
        %525 = sbr.rel (%p522) target = $region12
      $region11: #{tpu_custom_call.1} parent=5 // pred_region
        %s526 = ssub.s32 %s38, 1
        // Predicated region
        $region13: #{tpu_custom_call.1} parent=11 // pred_check
          %p527 = pneg %p330
        $region14: #{tpu_custom_call.1} parent=11 // pred_check_branch
          %529 = sbr.rel (%p527) target = $region16
        $region15: #{tpu_custom_call.1} parent=11 // pred_region
          %s531 = ssub.s32 256, 256
          %532 = vsyncadd [#allocation12], %s531
          %s533 = sshll.u32 [#allocation13], 4
          %s534 = int_to_ptr.vmem [resolvable:$true] %s533
          %539 = dma.hbm_to_vmem [thread:$0]  %s9, 256, %s534, [#allocation12], 64, 64, 4
        $region16: #{tpu_custom_call.1} parent=11 // pred_fallthru
          _
        // Predicated region
        $region17: #{tpu_custom_call.1} parent=11 // pred_check
          %p540 = pneg %p351
        $region18: #{tpu_custom_call.1} parent=11 // pred_check_branch
          %542 = sbr.rel (%p540) target = $region20
        $region19: #{tpu_custom_call.1} parent=11 // pred_region
          _
        $region20: #{tpu_custom_call.1} parent=11 // pred_fallthru
          _
        // Predicated region
        $region21: #{tpu_custom_call.1} parent=11 // pred_check
          %p543 = pneg %p372
        $region22: #{tpu_custom_call.1} parent=11 // pred_check_branch
          %545 = sbr.rel (%p543) target = $region24
        $region23: #{tpu_custom_call.1} parent=11 // pred_region
          %s547 = ssub.s32 512, 512
          %548 = vsyncadd [#allocation15], %s547
          %s549 = sshll.u32 [#allocation14], 4
          %s550 = int_to_ptr.vmem [resolvable:$true] %s549
          %555 = dma.hbm_to_vmem [thread:$0]  %s11, 512, %s550, [#allocation15], 128, 128, 8
        $region24: #{tpu_custom_call.1} parent=11 // pred_fallthru
          _
        // Predicated region
        $region25: #{tpu_custom_call.1} parent=11 // pred_check
          %p556 = pneg %p393
        $region26: #{tpu_custom_call.1} parent=11 // pred_check_branch
          %558 = sbr.rel (%p556) target = $region28
        $region27: #{tpu_custom_call.1} parent=11 // pred_region
          %s560 = ssub.s32 512, 512
          %561 = vsyncadd [#allocation15], %s560
          %s562 = sshll.u32 [#allocation16], 4
          %s563 = int_to_ptr.vmem [resolvable:$true] %s562
          %568 = dma.hbm_to_vmem [thread:$0]  %s12, 512, %s563, [#allocation15], 128, 128, 8
        $region28: #{tpu_custom_call.1} parent=11 // pred_fallthru
          _
        // Predicated region
        $region29: #{tpu_custom_call.1} parent=11 // pred_check
          %p569 = pneg %p414
        $region30: #{tpu_custom_call.1} parent=11 // pred_check_branch
          %571 = sbr.rel (%p569) target = $region32
        $region31: #{tpu_custom_call.1} parent=11 // pred_region
          %s573 = ssub.s32 512, 512
          %574 = vsyncadd [#allocation18], %s573
          %s575 = sshll.u32 [#allocation17], 4
          %s576 = int_to_ptr.vmem [resolvable:$true] %s575
          %581 = dma.hbm_to_vmem [thread:$0]  %s13, 512, %s576, [#allocation18], 128, 128, 8
        $region32: #{tpu_custom_call.1} parent=11 // pred_fallthru
          _
        // Predicated region
        $region33: #{tpu_custom_call.1} parent=11 // pred_check
          %p582 = pneg %p435
        $region34: #{tpu_custom_call.1} parent=11 // pred_check_branch
          %584 = sbr.rel (%p582) target = $region36
        $region35: #{tpu_custom_call.1} parent=11 // pred_region
          _
        $region36: #{tpu_custom_call.1} parent=11 // pred_fallthru
          _
        // Predicated region
        $region37: #{tpu_custom_call.1} parent=11 // pred_check
          %p585 = pneg %p456
        $region38: #{tpu_custom_call.1} parent=11 // pred_check_branch
          %587 = sbr.rel (%p585) target = $region40
        $region39: #{tpu_custom_call.1} parent=11 // pred_region
          _
        $region40: #{tpu_custom_call.1} parent=11 // pred_fallthru
          _
      $region12: #{tpu_custom_call.1} parent=5 // pred_fallthru
        _
      %p588 = scmp.lt.s32.totalorder %s38, 8
      // Predicated region
      $region41: #{tpu_custom_call.1} parent=5 // pred_check
        %p589 = pneg %p588
      $region42: #{tpu_custom_call.1} parent=5 // pred_check_branch
        %591 = sbr.rel (%p589) target = $region44
      $region43: #{tpu_custom_call.1} parent=5 // pred_region
        // Predicated region
        $region45: #{tpu_custom_call.1} parent=43 // pred_check
          %p592 = pneg %p79
        $region46: #{tpu_custom_call.1} parent=43 // pred_check_branch
          %594 = sbr.rel (%p592) target = $region48
        $region47: #{tpu_custom_call.1} parent=43 // pred_region
          %p595 = scmp.lt.s32.totalorder %s45, 1
          %s596 = scalar_select %p595, %s45, 1
          %p597 = scmp.lt.s32.totalorder %s46, 1
          %s598 = scalar_select %p597, %s46, 1
          %s599 = smul.addr %s596, 2
          %s600 = sadd.s32 %s598, %s599
          %s601 = smul.addr %s600, 8
          %s602 = scalar_lea.vmem %s0, %s601
        $region48: #{tpu_custom_call.1} parent=43 // pred_fallthru
          _
        // Predicated region
        $region49: #{tpu_custom_call.1} parent=43 // pred_check
          %p603 = pneg %p107
        $region50: #{tpu_custom_call.1} parent=43 // pred_check_branch
          %605 = sbr.rel (%p603) target = $region52
        $region51: #{tpu_custom_call.1} parent=43 // pred_region
          %p606 = scmp.lt.s32.totalorder %s45, 1
          %s607 = scalar_select %p606, %s45, 1
          %p608 = scmp.lt.s32.totalorder %s46, 1
          %s609 = scalar_select %p608, %s46, 1
          %s610 = smul.addr %s607, 2
          %s611 = sadd.s32 %s609, %s610
          %s612 = smul.addr %s611, 8
          %s613 = scalar_lea.vmem %s1, %s612
        $region52: #{tpu_custom_call.1} parent=43 // pred_fallthru
          _
        // Predicated region
        $region53: #{tpu_custom_call.1} parent=43 // pred_check
          %p614 = pneg %p135
        $region54: #{tpu_custom_call.1} parent=43 // pred_check_branch
          %616 = sbr.rel (%p614) target = $region56
        $region55: #{tpu_custom_call.1} parent=43 // pred_region
          %s617 = sand.u32 %s125, 1
          %s618 = scalar_lea.sflag [#allocation6], %s617
          %s619 = sand.u32 %s125, 1
          %s620 = smul.addr %s619, 8
          %s621 = scalar_lea.vmem [#allocation5], %s620
          %s623 = ssub.s32 128, 128
          %624 = vsyncadd %s618, %s623
          %s625 = smul.addr %s45, 2
          %s626 = sadd.s32 %s46, %s625
          %s627 = smul.addr %s626, 128
          %s628 = scalar_lea.hbm %s2, %s627
          %s630 = sshll.u32 %s621, 4
          %s631 = int_to_ptr.vmem [resolvable:$true] %s630
          %633 = dma.hbm_to_vmem [thread:$0]  %s628, 128, %s631, %s618
        $region56: #{tpu_custom_call.1} parent=43 // pred_fallthru
          _
        // Predicated region
        $region57: #{tpu_custom_call.1} parent=43 // pred_check
          %p634 = pneg %p163
        $region58: #{tpu_custom_call.1} parent=43 // pred_check_branch
          %636 = sbr.rel (%p634) target = $region60
        $region59: #{tpu_custom_call.1} parent=43 // pred_region
          %p637 = scmp.lt.s32.totalorder %s45, 1
          %s638 = scalar_select %p637, %s45, 1
          %p639 = scmp.lt.s32.totalorder %s46, 1
          %s640 = scalar_select %p639, %s46, 1
          %s641 = smul.addr %s638, 2
          %s642 = sadd.s32 %s640, %s641
          %s643 = smul.addr %s642, 8
          %s644 = scalar_lea.vmem %s3, %s643
        $region60: #{tpu_custom_call.1} parent=43 // pred_fallthru
          _
        // Predicated region
        $region61: #{tpu_custom_call.1} parent=43 // pred_check
          %p645 = pneg %p191
        $region62: #{tpu_custom_call.1} parent=43 // pred_check_branch
          %647 = sbr.rel (%p645) target = $region64
        $region63: #{tpu_custom_call.1} parent=43 // pred_region
          %s648 = sand.u32 %s38, 1
          %s649 = scalar_lea.sflag [#allocation9], %s648
          %s650 = sand.u32 %s181, 1
          %s651 = smul.addr %s650, 8
          %s652 = scalar_lea.vmem [#allocation8], %s651
          %s654 = ssub.s32 128, 128
          %655 = vsyncadd %s649, %s654
          %s656 = smul.addr %s45, 2
          %s657 = sadd.s32 %s46, %s656
          %s658 = smul.addr %s657, 128
          %s659 = scalar_lea.hbm %s4, %s658
          %s661 = sshll.u32 %s652, 4
          %s662 = int_to_ptr.vmem [resolvable:$true] %s661
          %664 = dma.hbm_to_vmem [thread:$0]  %s659, 128, %s662, %s649
        $region64: #{tpu_custom_call.1} parent=43 // pred_fallthru
          _
        // Predicated region
        $region65: #{tpu_custom_call.1} parent=43 // pred_check
          %p665 = pneg %p219
        $region66: #{tpu_custom_call.1} parent=43 // pred_check_branch
          %667 = sbr.rel (%p665) target = $region68
        $region67: #{tpu_custom_call.1} parent=43 // pred_region
          %s668 = sand.u32 %s38, 1
          %s669 = scalar_lea.sflag [#allocation9], %s668
          %s670 = sand.u32 %s209, 1
          %s671 = smul.addr %s670, 8
          %s672 = scalar_lea.vmem [#allocation10], %s671
          %s674 = ssub.s32 128, 128
          %675 = vsyncadd %s669, %s674
          %s676 = smul.addr %s45, 2
          %s677 = sadd.s32 %s47, %s676
          %s678 = smul.addr %s677, 128
          %s679 = scalar_lea.hbm %s5, %s678
          %s681 = sshll.u32 %s672, 4
          %s682 = int_to_ptr.vmem [resolvable:$true] %s681
          %684 = dma.hbm_to_vmem [thread:$0]  %s679, 128, %s682, %s669
        $region68: #{tpu_custom_call.1} parent=43 // pred_fallthru
          _
        // Predicated region
        $region69: #{tpu_custom_call.1} parent=43 // pred_check
          %p685 = pneg %p247
        $region70: #{tpu_custom_call.1} parent=43 // pred_check_branch
          %687 = sbr.rel (%p685) target = $region72
        $region71: #{tpu_custom_call.1} parent=43 // pred_region
          %p688 = scmp.lt.s32.totalorder %s45, 1
          %s689 = scalar_select %p688, %s45, 1
          %p690 = scmp.lt.s32.totalorder %s47, 1
          %s691 = scalar_select %p690, %s47, 1
          %s692 = smul.addr %s689, 2
          %s693 = sadd.s32 %s691, %s692
          %s694 = smul.addr %s693, 8
          %s695 = scalar_lea.vmem %s6, %s694
        $region72: #{tpu_custom_call.1} parent=43 // pred_fallthru
          _
        // Predicated region
        $region73: #{tpu_custom_call.1} parent=43 // pred_check
          %p696 = pneg %p275
        $region74: #{tpu_custom_call.1} parent=43 // pred_check_branch
          %698 = sbr.rel (%p696) target = $region76
        $region75: #{tpu_custom_call.1} parent=43 // pred_region
          %s699 = sand.u32 %s38, 1
          %s700 = scalar_lea.sflag [#allocation12], %s699
          %s701 = sand.u32 %s265, 1
          %s702 = smul.addr %s701, 8
          %s703 = scalar_lea.vmem [#allocation11], %s702
          %s705 = ssub.s32 128, 128
          %706 = vsyncadd %s700, %s705
          %s707 = smul.addr %s45, 2
          %s708 = sadd.s32 %s47, %s707
          %s709 = smul.addr %s708, 128
          %s710 = scalar_lea.hbm %s7, %s709
          %s712 = sshll.u32 %s703, 4
          %s713 = int_to_ptr.vmem [resolvable:$true] %s712
          %715 = dma.hbm_to_vmem [thread:$0]  %s710, 128, %s713, %s700
        $region76: #{tpu_custom_call.1} parent=43 // pred_fallthru
          _
        // Predicated region
        $region77: #{tpu_custom_call.1} parent=43 // pred_check
          %p716 = pneg %p303
        $region78: #{tpu_custom_call.1} parent=43 // pred_check_branch
          %718 = sbr.rel (%p716) target = $region80
        $region79: #{tpu_custom_call.1} parent=43 // pred_region
          %p719 = scmp.lt.s32.totalorder %s45, 1
          %s720 = scalar_select %p719, %s45, 1
          %p721 = scmp.lt.s32.totalorder %s47, 1
          %s722 = scalar_select %p721, %s47, 1
          %s723 = smul.addr %s720, 2
          %s724 = sadd.s32 %s722, %s723
          %s725 = smul.addr %s724, 8
          %s726 = scalar_lea.vmem %s8, %s725
        $region80: #{tpu_custom_call.1} parent=43 // pred_fallthru
          _
      $region44: #{tpu_custom_call.1} parent=5 // pred_fallthru
        _
      %p727 = scmp.le.s32.totalorder 1, %s38
      %p728 = scmp.lt.s32.totalorder %s38, 9
      %p729 = pnand %p727, %p728
      %p730 = pneg %p729
      // Predicated region
      $region81: #{tpu_custom_call.1} parent=5 // pred_check
        _
      $region82: #{tpu_custom_call.1} parent=5 // pred_check_branch
        %732 = sbr.rel (%p729) target = $region84
      $region83: #{tpu_custom_call.1} parent=5 // pred_region
        %s733 = ssub.s32 %s38, 1
        %s734 = sand.u32 %s128, 1
        %s735 = scalar_lea.sflag [#allocation6], %s734
        %s736 = sand.u32 %s128, 1
        %s737 = smul.addr %s736, 8
        %s738 = scalar_lea.vmem [#allocation5], %s737
        // Predicated region
        $region85: #{tpu_custom_call.1} parent=83 // pred_check
          %p739 = pneg %p141
        $region86: #{tpu_custom_call.1} parent=83 // pred_check_branch
          %741 = sbr.rel (%p739) target = $region88
        $region87: #{tpu_custom_call.1} parent=83 // pred_region
          %742 = dma.done %s735, 128
        $region88: #{tpu_custom_call.1} parent=83 // pred_fallthru
          _
        %s743 = sand.u32 %s43, 1
        %s744 = scalar_lea.sflag [#allocation9], %s743
        %s745 = sand.u32 %s184, 1
        %s746 = smul.addr %s745, 8
        %s747 = scalar_lea.vmem [#allocation8], %s746
        // Predicated region
        $region89: #{tpu_custom_call.1} parent=83 // pred_check
          %p748 = pneg %p197
        $region90: #{tpu_custom_call.1} parent=83 // pred_check_branch
          %750 = sbr.rel (%p748) target = $region92
        $region91: #{tpu_custom_call.1} parent=83 // pred_region
          %751 = dma.done %s744, 128
        $region92: #{tpu_custom_call.1} parent=83 // pred_fallthru
          _
        %s752 = sand.u32 %s43, 1
        %s753 = scalar_lea.sflag [#allocation9], %s752
        %s754 = sand.u32 %s212, 1
        %s755 = smul.addr %s754, 8
        %s756 = scalar_lea.vmem [#allocation10], %s755
        // Predicated region
        $region93: #{tpu_custom_call.1} parent=83 // pred_check
          %p757 = pneg %p225
        $region94: #{tpu_custom_call.1} parent=83 // pred_check_branch
          %759 = sbr.rel (%p757) target = $region96
        $region95: #{tpu_custom_call.1} parent=83 // pred_region
          %760 = dma.done %s753, 128
        $region96: #{tpu_custom_call.1} parent=83 // pred_fallthru
          _
        %s761 = sand.u32 %s43, 1
        %s762 = scalar_lea.sflag [#allocation12], %s761
        %s763 = sand.u32 %s268, 1
        %s764 = smul.addr %s763, 8
        %s765 = scalar_lea.vmem [#allocation11], %s764
        // Predicated region
        $region97: #{tpu_custom_call.1} parent=83 // pred_check
          %p766 = pneg %p281
        $region98: #{tpu_custom_call.1} parent=83 // pred_check_branch
          %768 = sbr.rel (%p766) target = $region100
        $region99: #{tpu_custom_call.1} parent=83 // pred_region
          %769 = dma.done %s762, 128
        $region100: #{tpu_custom_call.1} parent=83 // pred_fallthru
          _
        // Predicated region
        $region101: #{tpu_custom_call.1} parent=83 // pred_check
          %p770 = pneg %p330
        $region102: #{tpu_custom_call.1} parent=83 // pred_check_branch
          %772 = sbr.rel (%p770) target = $region104
        $region103: #{tpu_custom_call.1} parent=83 // pred_region
          %773 = dma.done [#allocation12], 256
        $region104: #{tpu_custom_call.1} parent=83 // pred_fallthru
          _
        // Predicated region
        $region105: #{tpu_custom_call.1} parent=83 // pred_check
          %p774 = pneg %p372
        $region106: #{tpu_custom_call.1} parent=83 // pred_check_branch
          %776 = sbr.rel (%p774) target = $region108
        $region107: #{tpu_custom_call.1} parent=83 // pred_region
          %777 = dma.done [#allocation15], 512
        $region108: #{tpu_custom_call.1} parent=83 // pred_fallthru
          _
        // Predicated region
        $region109: #{tpu_custom_call.1} parent=83 // pred_check
          %p778 = pneg %p393
        $region110: #{tpu_custom_call.1} parent=83 // pred_check_branch
          %780 = sbr.rel (%p778) target = $region112
        $region111: #{tpu_custom_call.1} parent=83 // pred_region
          %781 = dma.done [#allocation15], 512
        $region112: #{tpu_custom_call.1} parent=83 // pred_fallthru
          _
        // Predicated region
        $region113: #{tpu_custom_call.1} parent=83 // pred_check
          %p782 = pneg %p414
        $region114: #{tpu_custom_call.1} parent=83 // pred_check_branch
          %784 = sbr.rel (%p782) target = $region116
        $region115: #{tpu_custom_call.1} parent=83 // pred_region
          %785 = dma.done [#allocation18], 512
        $region116: #{tpu_custom_call.1} parent=83 // pred_fallthru
          _
        %p786 = scmp.lt.s32.totalorder %s48, 1
        %s787 = scalar_select %p786, %s48, 1
        %p788 = scmp.lt.s32.totalorder %s49, 1
        %s789 = scalar_select %p788, %s49, 1
        %s790 = smul.addr %s787, 2
        %s791 = sadd.s32 %s789, %s790
        %s792 = smul.addr %s791, 8
        %s793 = scalar_lea.vmem %s0, %s792
        %p794 = pneg %p85
        %p795 = pneg %p82
        %p796 = scmp.lt.s32.totalorder %s48, 1
        %s797 = scalar_select %p796, %s48, 1
        %p798 = scmp.lt.s32.totalorder %s49, 1
        %s799 = scalar_select %p798, %s49, 1
        %s800 = smul.addr %s797, 2
        %s801 = sadd.s32 %s799, %s800
        %s802 = smul.addr %s801, 8
        %s803 = scalar_lea.vmem %s1, %s802
        %p804 = pneg %p113
        %p805 = pneg %p110
        %s806 = sand.u32 %s128, 1
        %s807 = scalar_lea.sflag [#allocation6], %s806
        %s808 = sand.u32 %s128, 1
        %s809 = smul.addr %s808, 8
        %s810 = scalar_lea.vmem [#allocation5], %s809
        %p811 = pneg %p141
        %p812 = pneg %p138
        %p813 = scmp.lt.s32.totalorder %s48, 1
        %s814 = scalar_select %p813, %s48, 1
        %p815 = scmp.lt.s32.totalorder %s49, 1
        %s816 = scalar_select %p815, %s49, 1
        %s817 = smul.addr %s814, 2
        %s818 = sadd.s32 %s816, %s817
        %s819 = smul.addr %s818, 8
        %s820 = scalar_lea.vmem %s3, %s819
        %p821 = pneg %p169
        %p822 = pneg %p166
        %s823 = sand.u32 %s43, 1
        %s824 = scalar_lea.sflag [#allocation9], %s823
        %s825 = sand.u32 %s184, 1
        %s826 = smul.addr %s825, 8
        %s827 = scalar_lea.vmem [#allocation8], %s826
        %p828 = pneg %p197
        %p829 = pneg %p194
        %s830 = sand.u32 %s43, 1
        %s831 = scalar_lea.sflag [#allocation9], %s830
        %s832 = sand.u32 %s212, 1
        %s833 = smul.addr %s832, 8
        %s834 = scalar_lea.vmem [#allocation10], %s833
        %p835 = pneg %p225
        %p836 = pneg %p222
        %p837 = scmp.lt.s32.totalorder %s48, 1
        %s838 = scalar_select %p837, %s48, 1
        %p839 = scmp.lt.s32.totalorder %s50, 1
        %s840 = scalar_select %p839, %s50, 1
        %s841 = smul.addr %s838, 2
        %s842 = sadd.s32 %s840, %s841
        %s843 = smul.addr %s842, 8
        %s844 = scalar_lea.vmem %s6, %s843
        %p845 = pneg %p253
        %p846 = pneg %p250
        %s847 = sand.u32 %s43, 1
        %s848 = scalar_lea.sflag [#allocation12], %s847
        %s849 = sand.u32 %s268, 1
        %s850 = smul.addr %s849, 8
        %s851 = scalar_lea.vmem [#allocation11], %s850
        %p852 = pneg %p281
        %p853 = pneg %p278
        %p854 = scmp.lt.s32.totalorder %s48, 1
        %s855 = scalar_select %p854, %s48, 1
        %p856 = scmp.lt.s32.totalorder %s50, 1
        %s857 = scalar_select %p856, %s50, 1
        %s858 = smul.addr %s855, 2
        %s859 = sadd.s32 %s857, %s858
        %s860 = smul.addr %s859, 8
        %s861 = scalar_lea.vmem %s8, %s860
        %p862 = pneg %p309
        %p863 = pneg %p306
        %p864 = pneg %p330
        %p865 = pneg %p327
        %p866 = pneg %p351
        %p867 = pneg %p348
        %p868 = pneg %p372
        %p869 = pneg %p369
        %p870 = pneg %p393
        %p871 = pneg %p390
        %p872 = pneg %p414
        %p873 = pneg %p411
        %p874 = pneg %p435
        %p875 = pneg %p432
        %p876 = pneg %p456
        %p877 = pneg %p453
        %p878 = pneg %p484
        %p879 = pneg %p481
        %s880 = sand.u32 %s471, 1
        %s881 = scalar_lea.sflag [#allocation7], %s880
        %s882 = sand.u32 %s471, 1
        %s883 = smul.addr %s882, 8
        %s884 = scalar_lea.vmem [#allocation19], %s883
        %p885 = pneg %p512
        %p886 = pneg %p509
        %p887 = scmp.lt.s32.totalorder %s48, 1
        %s888 = scalar_select %p887, %s48, 1
        %p889 = scmp.lt.s32.totalorder %s49, 1
        %s890 = scalar_select %p889, %s49, 1
        %s891 = smul.addr %s888, 2
        %s892 = sadd.s32 %s890, %s891
        %s893 = smul.addr %s892, 8
        %s894 = scalar_lea.vmem %s17, %s893
        %p895 = scmp.lt.s32.totalorder %s48, 1
        %s896 = scalar_select %p895, %s48, 1
        %p897 = scmp.lt.s32.totalorder %s49, 1
        %s898 = scalar_select %p897, %s49, 1
        %s899 = smul.addr %s896, 2
        %s900 = sadd.s32 %s898, %s899
        %s901 = smul.addr %s900, 8
        %s902 = scalar_lea.vmem %s0, %s901
        %p903 = scmp.lt.s32.totalorder %s48, 1
        %s904 = scalar_select %p903, %s48, 1
        %p905 = scmp.lt.s32.totalorder %s49, 1
        %s906 = scalar_select %p905, %s49, 1
        %s907 = smul.addr %s904, 2
        %s908 = sadd.s32 %s906, %s907
        %s909 = smul.addr %s908, 8
        %s910 = scalar_lea.vmem %s1, %s909
        %p911 = scmp.lt.s32.totalorder %s48, 1
        %s912 = scalar_select %p911, %s48, 1
        %p913 = scmp.lt.s32.totalorder %s49, 1
        %s914 = scalar_select %p913, %s49, 1
        %s915 = smul.addr %s912, 2
        %s916 = sadd.s32 %s914, %s915
        %s917 = smul.addr %s916, 8
        %s918 = scalar_lea.vmem %s3, %s917
        %p919 = scmp.lt.s32.totalorder %s48, 1
        %s920 = scalar_select %p919, %s48, 1
        %p921 = scmp.lt.s32.totalorder %s50, 1
        %s922 = scalar_select %p921, %s50, 1
        %s923 = smul.addr %s920, 2
        %s924 = sadd.s32 %s922, %s923
        %s925 = smul.addr %s924, 8
        %s926 = scalar_lea.vmem %s6, %s925
        %p927 = scmp.lt.s32.totalorder %s48, 1
        %s928 = scalar_select %p927, %s48, 1
        %p929 = scmp.lt.s32.totalorder %s50, 1
        %s930 = scalar_select %p929, %s50, 1
        %s931 = smul.addr %s928, 2
        %s932 = sadd.s32 %s930, %s931
        %s933 = smul.addr %s932, 8
        %s934 = scalar_lea.vmem %s8, %s933
        %p935 = scmp.lt.s32.totalorder %s48, 1
        %s936 = scalar_select %p935, %s48, 1
        %p937 = scmp.lt.s32.totalorder %s49, 1
        %s938 = scalar_select %p937, %s49, 1
        %s939 = smul.addr %s936, 2
        %s940 = sadd.s32 %s938, %s939
        %s941 = smul.addr %s940, 8
        %s942 = scalar_lea.vmem %s17, %s941
        %p944 = scmp.eq.s32.totalorder %s50, 0
        // Predicated region
        $region117: #{tpu_custom_call.1} parent=83 // pred_check
          %p945 = pneg %p944
        $region118: #{tpu_custom_call.1} parent=83 // pred_check_branch
          %947 = sbr.rel (%p945) target = $region120
        $region119: #{tpu_custom_call.1} parent=83 // pred_region
          %vm948 = vcmask 261120
          %949 = vst.msk [vmem:[#allocation2] sm:$0xff] %vm948, 0.0
          %vm950 = vcmask 7168
          %951 = vst.msk [vmem:[#allocation3] sm:$0xff] %vm950, 0.0
          %vm952 = vcmask 23552
          %953 = vst.msk [vmem:[#allocation4] sm:$0xff] %vm952, 0.0
        $region120: #{tpu_custom_call.1} parent=83 // pred_fallthru
          _
        %v954 = vld [vmem:[%s902] sm:$0xff]
        %v955 = vld [vmem:[%s910] sm:$0xff]
        %v956 = vld [vmem:[%s738] sm:$0xff]
        %v957 = vld [vmem:[%s756] sm:$0xff]
        %v958 = vld [vmem:[%s926] sm:$0xff]
        %v959 = vld [vmem:[%s765] sm:$0xff]
        %v960 = vld [vmem:[%s934] sm:$0xff]
        %v961 = vld [vmem:[%s14] sm:$0xf]
        %v963 = vcombine.high %v955, %v955
        %v965 = vunpack.c.l.s4 1966171168
        %v966 = vunpack.c.0.s8 %v965
        %v967 = vlaneseq
        %v968 = vshrl.u32 %v967, 7
        %v969 = vsub.s32 %v966, %v968
        %v970 = vrot.slane %v955, %v969
        %v972 = vunpack.c.l.s4 1966171168
        %v973 = vunpack.c.0.s8 %v972
        %v974 = vlaneseq
        %v975 = vshrl.u32 %v974, 7
        %v976 = vsub.s32 %v973, %v975
        %v977 = vrot.slane %v963, %v976
        %v978 = vcombine.high %v970, %v970
        %v979 = vcombine.high %v977, %v977
        %v981 = vunpack.c.l.s4 1966171168
        %v982 = vunpack.c.0.s8 %v981
        %v983 = vlaneseq
        %v984 = vshrl.u32 %v983, 7
        %v985 = vsub.s32 %v982, %v984
        %v986 = vrot.slane %v970, %v985
        %v988 = vunpack.c.l.s4 1966171168
        %v989 = vunpack.c.0.s8 %v988
        %v990 = vlaneseq
        %v991 = vshrl.u32 %v990, 7
        %v992 = vsub.s32 %v989, %v991
        %v993 = vrot.slane %v977, %v992
        %v995 = vunpack.c.l.s4 1966171168
        %v996 = vunpack.c.0.s8 %v995
        %v997 = vlaneseq
        %v998 = vshrl.u32 %v997, 7
        %v999 = vsub.s32 %v996, %v998
        %v1000 = vrot.slane %v978, %v999
        %v1002 = vunpack.c.l.s4 1966171168
        %v1003 = vunpack.c.0.s8 %v1002
        %v1004 = vlaneseq
        %v1005 = vshrl.u32 %v1004, 7
        %v1006 = vsub.s32 %v1003, %v1005
        %v1007 = vrot.slane %v979, %v1006
        %v1008 = vcombine.high %v986, %v986
        %v1009 = vcombine.high %v993, %v993
        %v1010 = vcombine.high %v1000, %v1000
        %v1011 = vcombine.high %v1007, %v1007
        %v1012 = vlaneseq
        %v1013 = vshrl.u32 %v1012, 7
        %v1014 = vsub.s32 0, %v1013
        %v1015 = vrot.slane %v986, %v1014
        %v1016 = vlaneseq
        %v1017 = vshrl.u32 %v1016, 7
        %v1018 = vsub.s32 0, %v1017
        %v1019 = vrot.slane %v1000, %v1018
        %v1020 = vlaneseq
        %v1021 = vshrl.u32 %v1020, 7
        %v1022 = vsub.s32 0, %v1021
        %v1023 = vrot.slane %v1008, %v1022
        %v1024 = vlaneseq
        %v1025 = vshrl.u32 %v1024, 7
        %v1026 = vsub.s32 0, %v1025
        %v1027 = vrot.slane %v1010, %v1026
        %v1028 = vlaneseq
        %v1029 = vshrl.u32 %v1028, 7
        %v1030 = vsub.s32 0, %v1029
        %v1031 = vrot.slane %v993, %v1030
        %v1032 = vlaneseq
        %v1033 = vshrl.u32 %v1032, 7
        %v1034 = vsub.s32 0, %v1033
        %v1035 = vrot.slane %v1007, %v1034
        %v1036 = vlaneseq
        %v1037 = vshrl.u32 %v1036, 7
        %v1038 = vsub.s32 0, %v1037
        %v1039 = vrot.slane %v1009, %v1038
        %v1040 = vlaneseq
        %v1041 = vshrl.u32 %v1040, 7
        %v1042 = vsub.s32 0, %v1041
        %v1043 = vrot.slane %v1011, %v1042
        %v1052 = vmul.f32 %v1015, %v958
        %v1053 = vmul.f32 %v1019, %v958
        %v1054 = vmul.f32 %v1023, %v958
        %v1055 = vmul.f32 %v1027, %v958
        %v1056 = vmul.f32 %v1031, %v958
        %v1057 = vmul.f32 %v1035, %v958
        %v1058 = vmul.f32 %v1039, %v958
        %v1059 = vmul.f32 %v1043, %v958
        %v1061 = vcombine.high %v956, %v956
        %v1063 = vunpack.c.l.s4 1966171168
        %v1064 = vunpack.c.0.s8 %v1063
        %v1065 = vlaneseq
        %v1066 = vshrl.u32 %v1065, 7
        %v1067 = vsub.s32 %v1064, %v1066
        %v1068 = vrot.slane %v956, %v1067
        %v1070 = vunpack.c.l.s4 1966171168
        %v1071 = vunpack.c.0.s8 %v1070
        %v1072 = vlaneseq
        %v1073 = vshrl.u32 %v1072, 7
        %v1074 = vsub.s32 %v1071, %v1073
        %v1075 = vrot.slane %v1061, %v1074
        %v1076 = vcombine.high %v1068, %v1068
        %v1077 = vcombine.high %v1075, %v1075
        %v1079 = vunpack.c.l.s4 1966171168
        %v1080 = vunpack.c.0.s8 %v1079
        %v1081 = vlaneseq
        %v1082 = vshrl.u32 %v1081, 7
        %v1083 = vsub.s32 %v1080, %v1082
        %v1084 = vrot.slane %v1068, %v1083
        %v1086 = vunpack.c.l.s4 1966171168
        %v1087 = vunpack.c.0.s8 %v1086
        %v1088 = vlaneseq
        %v1089 = vshrl.u32 %v1088, 7
        %v1090 = vsub.s32 %v1087, %v1089
        %v1091 = vrot.slane %v1075, %v1090
        %v1093 = vunpack.c.l.s4 1966171168
        %v1094 = vunpack.c.0.s8 %v1093
        %v1095 = vlaneseq
        %v1096 = vshrl.u32 %v1095, 7
        %v1097 = vsub.s32 %v1094, %v1096
        %v1098 = vrot.slane %v1076, %v1097
        %v1100 = vunpack.c.l.s4 1966171168
        %v1101 = vunpack.c.0.s8 %v1100
        %v1102 = vlaneseq
        %v1103 = vshrl.u32 %v1102, 7
        %v1104 = vsub.s32 %v1101, %v1103
        %v1105 = vrot.slane %v1077, %v1104
        %v1106 = vcombine.high %v1084, %v1084
        %v1107 = vcombine.high %v1091, %v1091
        %v1108 = vcombine.high %v1098, %v1098
        %v1109 = vcombine.high %v1105, %v1105
        %v1110 = vlaneseq
        %v1111 = vshrl.u32 %v1110, 7
        %v1112 = vsub.s32 0, %v1111
        %v1113 = vrot.slane %v1084, %v1112
        %v1114 = vlaneseq
        %v1115 = vshrl.u32 %v1114, 7
        %v1116 = vsub.s32 0, %v1115
        %v1117 = vrot.slane %v1098, %v1116
        %v1118 = vlaneseq
        %v1119 = vshrl.u32 %v1118, 7
        %v1120 = vsub.s32 0, %v1119
        %v1121 = vrot.slane %v1106, %v1120
        %v1122 = vlaneseq
        %v1123 = vshrl.u32 %v1122, 7
        %v1124 = vsub.s32 0, %v1123
        %v1125 = vrot.slane %v1108, %v1124
        %v1126 = vlaneseq
        %v1127 = vshrl.u32 %v1126, 7
        %v1128 = vsub.s32 0, %v1127
        %v1129 = vrot.slane %v1091, %v1128
        %v1130 = vlaneseq
        %v1131 = vshrl.u32 %v1130, 7
        %v1132 = vsub.s32 0, %v1131
        %v1133 = vrot.slane %v1105, %v1132
        %v1134 = vlaneseq
        %v1135 = vshrl.u32 %v1134, 7
        %v1136 = vsub.s32 0, %v1135
        %v1137 = vrot.slane %v1107, %v1136
        %v1138 = vlaneseq
        %v1139 = vshrl.u32 %v1138, 7
        %v1140 = vsub.s32 0, %v1139
        %v1141 = vrot.slane %v1109, %v1140
        %v1150 = vmul.f32 %v1113, %v959
        %v1151 = vmul.f32 %v1117, %v959
        %v1152 = vmul.f32 %v1121, %v959
        %v1153 = vmul.f32 %v1125, %v959
        %v1154 = vmul.f32 %v1129, %v959
        %v1155 = vmul.f32 %v1133, %v959
        %v1156 = vmul.f32 %v1137, %v959
        %v1157 = vmul.f32 %v1141, %v959
        %v1158 = vadd.f32 %v1052, %v1150
        %v1159 = vadd.f32 %v1053, %v1151
        %v1160 = vadd.f32 %v1054, %v1152
        %v1161 = vadd.f32 %v1055, %v1153
        %v1162 = vadd.f32 %v1056, %v1154
        %v1163 = vadd.f32 %v1057, %v1155
        %v1164 = vadd.f32 %v1058, %v1156
        %v1165 = vadd.f32 %v1059, %v1157
        %v1166 = vpack.c.bf16 %v1159, %v1158
        %v1167 = vpack.c.bf16 %v1161, %v1160
        %v1168 = vpack.c.bf16 %v1163, %v1162
        %v1169 = vpack.c.bf16 %v1165, %v1164
        %v1170 = vld [vmem:[#allocation13] sm:$0xf]
        %v1171 = vld [vmem:[#allocation13 + $0x4] sm:$0xf]
        %v1172 = vld [vmem:[#allocation13 + $0x8] sm:$0xf]
        %v1173 = vld [vmem:[#allocation13 + $0xc] sm:$0xf]
        %v1178 = vunpack.c.l.b16 %v1170
        %v1179 = vunpack.c.l.b16 %v1171
        %v1180 = vunpack.c.l.b16 %v1172
        %v1181 = vunpack.c.l.b16 %v1173
        %v1182 = vpack.c.b16 %v1179, %v1178
        %v1183 = vpack.c.b16 %v1181, %v1180
        %vm1186 = vcmask 261120
        %v1188 = vsel %vm1186, %v1166, 0
        %v1191 = vsel %vm1186, %v1167, 0
        %v1194 = vsel %vm1186, %v1168, 0
        %v1197 = vsel %vm1186, %v1169, 0
        %1199 = vmatprep.subr.bf16.mxu0 0
        %1200 = vmatpush1.bf16.msra.mxu0 %v1182
        %1201 = vmatprep.subr.bf16.mxu0 0
        %1202 = vmatpush1.bf16.msra.mxu0 %v1183
        %1203 = vmatprep.subr.bf16.mxu0 0
        %1204 = vmatpush1.bf16.msra.mxu0 0
        %1205 = vmatprep.subr.bf16.mxu0 0
        %1206 = vmatpush1.bf16.msra.mxu0 0
        %1207 = vmatprep.subr.bf16.mxu0 0
        %1208 = vmatpush1.bf16.msra.mxu0 0
        %1209 = vmatprep.subr.bf16.mxu0 0
        %1210 = vmatpush1.bf16.msra.mxu0 0
        %1211 = vmatprep.subr.bf16.mxu0 0
        %1212 = vmatpush1.bf16.msra.mxu0 0
        %1213 = vmatprep.subr.bf16.mxu0 0
        %1214 = vmatpush1.bf16.msra.mxu0 0
        %1215 = vmatprep.subr.bf16.mxu0 0
        %1216 = vmatpush1.bf16.msra.mxu0 0
        %1217 = vmatprep.subr.bf16.mxu0 0
        %1218 = vmatpush1.bf16.msra.mxu0 0
        %1219 = vmatprep.subr.bf16.mxu0 0
        %1220 = vmatpush1.bf16.msra.mxu0 0
        %1221 = vmatprep.subr.bf16.mxu0 0
        %1222 = vmatpush1.bf16.msra.mxu0 0
        %1223 = vmatprep.subr.bf16.mxu0 0
        %1224 = vmatpush1.bf16.msra.mxu0 0
        %1225 = vmatprep.subr.bf16.mxu0 0
        %1226 = vmatpush1.bf16.msra.mxu0 0
        %1227 = vmatprep.subr.bf16.mxu0 0
        %1228 = vmatpush1.bf16.msra.mxu0 0
        %1229 = vmatprep.subr.bf16.mxu0 0
        %1230 = vmatpush1.bf16.msra.mxu0 0
        %1231 = vmatprep.mubr.bf16.mxu0 0
        %1232 = vmatmul.mubr.bf16.gmra.mrb[0].mxu0 %v1188
        %v1233 = vpop.f32.mrb[0].mxu0
        %v1234 = vadd.f32 0.0, %v1233
        %v1235 = vpop.f32.mrb[0].mxu0
        %v1236 = vpop.f32.mrb[0].mxu0
        %v1237 = vadd.f32 0.0, %v1236
        %v1238 = vpop.f32.mrb[0].mxu0
        %1239 = vmatprep.mubr.bf16.mxu0 0
        %1240 = vmatmul.mubr.bf16.gmra.mrb[0].mxu0 %v1191
        %v1241 = vpop.f32.mrb[0].mxu0
        %v1242 = vadd.f32 0.0, %v1241
        %v1243 = vpop.f32.mrb[0].mxu0
        %v1244 = vpop.f32.mrb[0].mxu0
        %v1245 = vadd.f32 0.0, %v1244
        %v1246 = vpop.f32.mrb[0].mxu0
        %1247 = vmatprep.mubr.bf16.mxu0 0
        %1248 = vmatmul.mubr.bf16.gmra.mrb[0].mxu0 %v1194
        %v1249 = vpop.f32.mrb[0].mxu0
        %v1250 = vadd.f32 0.0, %v1249
        %v1251 = vpop.f32.mrb[0].mxu0
        %v1252 = vpop.f32.mrb[0].mxu0
        %v1253 = vadd.f32 0.0, %v1252
        %v1254 = vpop.f32.mrb[0].mxu0
        %1255 = vmatprep.mubr.bf16.mxu0 0
        %1256 = vmatmul.mubr.bf16.gmra.mrb[0].mxu0 %v1197
        %v1257 = vpop.f32.mrb[0].mxu0
        %v1258 = vadd.f32 0.0, %v1257
        %v1259 = vpop.f32.mrb[0].mxu0
        %v1260 = vpop.f32.mrb[0].mxu0
        %v1261 = vadd.f32 0.0, %v1260
        %v1262 = vpop.f32.mrb[0].mxu0
        %1263 = vdwg.mxu0
        %v1265 = vcombine.high %v954, %v954
        %v1267 = vunpack.c.l.s4 1966171168
        %v1268 = vunpack.c.0.s8 %v1267
        %v1269 = vlaneseq
        %v1270 = vshrl.u32 %v1269, 7
        %v1271 = vsub.s32 %v1268, %v1270
        %v1272 = vrot.slane %v954, %v1271
        %v1274 = vunpack.c.l.s4 1966171168
        %v1275 = vunpack.c.0.s8 %v1274
        %v1276 = vlaneseq
        %v1277 = vshrl.u32 %v1276, 7
        %v1278 = vsub.s32 %v1275, %v1277
        %v1279 = vrot.slane %v1265, %v1278
        %v1280 = vcombine.high %v1272, %v1272
        %v1281 = vcombine.high %v1279, %v1279
        %v1283 = vunpack.c.l.s4 1966171168
        %v1284 = vunpack.c.0.s8 %v1283
        %v1285 = vlaneseq
        %v1286 = vshrl.u32 %v1285, 7
        %v1287 = vsub.s32 %v1284, %v1286
        %v1288 = vrot.slane %v1272, %v1287
        %v1290 = vunpack.c.l.s4 1966171168
        %v1291 = vunpack.c.0.s8 %v1290
        %v1292 = vlaneseq
        %v1293 = vshrl.u32 %v1292, 7
        %v1294 = vsub.s32 %v1291, %v1293
        %v1295 = vrot.slane %v1279, %v1294
        %v1297 = vunpack.c.l.s4 1966171168
        %v1298 = vunpack.c.0.s8 %v1297
        %v1299 = vlaneseq
        %v1300 = vshrl.u32 %v1299, 7
        %v1301 = vsub.s32 %v1298, %v1300
        %v1302 = vrot.slane %v1280, %v1301
        %v1304 = vunpack.c.l.s4 1966171168
        %v1305 = vunpack.c.0.s8 %v1304
        %v1306 = vlaneseq
        %v1307 = vshrl.u32 %v1306, 7
        %v1308 = vsub.s32 %v1305, %v1307
        %v1309 = vrot.slane %v1281, %v1308
        %v1310 = vcombine.high %v1288, %v1288
        %v1311 = vcombine.high %v1295, %v1295
        %v1312 = vcombine.high %v1302, %v1302
        %v1313 = vcombine.high %v1309, %v1309
        %v1314 = vlaneseq
        %v1315 = vshrl.u32 %v1314, 7
        %v1316 = vsub.s32 0, %v1315
        %v1317 = vrot.slane %v1288, %v1316
        %v1318 = vlaneseq
        %v1319 = vshrl.u32 %v1318, 7
        %v1320 = vsub.s32 0, %v1319
        %v1321 = vrot.slane %v1302, %v1320
        %v1322 = vlaneseq
        %v1323 = vshrl.u32 %v1322, 7
        %v1324 = vsub.s32 0, %v1323
        %v1325 = vrot.slane %v1310, %v1324
        %v1326 = vlaneseq
        %v1327 = vshrl.u32 %v1326, 7
        %v1328 = vsub.s32 0, %v1327
        %v1329 = vrot.slane %v1312, %v1328
        %v1330 = vlaneseq
        %v1331 = vshrl.u32 %v1330, 7
        %v1332 = vsub.s32 0, %v1331
        %v1333 = vrot.slane %v1295, %v1332
        %v1334 = vlaneseq
        %v1335 = vshrl.u32 %v1334, 7
        %v1336 = vsub.s32 0, %v1335
        %v1337 = vrot.slane %v1309, %v1336
        %v1338 = vlaneseq
        %v1339 = vshrl.u32 %v1338, 7
        %v1340 = vsub.s32 0, %v1339
        %v1341 = vrot.slane %v1311, %v1340
        %v1342 = vlaneseq
        %v1343 = vshrl.u32 %v1342, 7
        %v1344 = vsub.s32 0, %v1343
        %v1345 = vrot.slane %v1313, %v1344
        %v1354 = vadd.f32 %v1234, %v1317
        %v1355 = vadd.f32 %v1237, %v1321
        %v1356 = vadd.f32 %v1242, %v1325
        %v1357 = vadd.f32 %v1245, %v1329
        %v1358 = vadd.f32 %v1250, %v1333
        %v1359 = vadd.f32 %v1253, %v1337
        %v1360 = vadd.f32 %v1258, %v1341
        %v1361 = vadd.f32 %v1261, %v1345
        %v1362 = vadd.f32 %v1354, %v957
        %v1363 = vadd.f32 %v1355, %v957
        %v1364 = vadd.f32 %v1356, %v957
        %v1365 = vadd.f32 %v1357, %v957
        %v1366 = vadd.f32 %v1358, %v957
        %v1367 = vadd.f32 %v1359, %v957
        %v1368 = vadd.f32 %v1360, %v957
        %v1369 = vadd.f32 %v1361, %v957
        %v1370 = vsub.f32 0.0, %v1362
        %v1371 = vsub.f32 0.0, %v1363
        %v1372 = vsub.f32 0.0, %v1364
        %v1373 = vsub.f32 0.0, %v1365
        %v1374 = vsub.f32 0.0, %v1366
        %v1375 = vsub.f32 0.0, %v1367
        %v1376 = vsub.f32 0.0, %v1368
        %v1377 = vsub.f32 0.0, %v1369
        %v1378 = vmul.f32 %v1370, 1.442695
        %v1379 = vpow.pop %v1378
        %v1380 = vmul.f32 %v1371, 1.442695
        %v1381 = vpow.pop %v1380
        %v1382 = vmul.f32 %v1372, 1.442695
        %v1383 = vpow.pop %v1382
        %v1384 = vmul.f32 %v1373, 1.442695
        %v1385 = vpow.pop %v1384
        %v1386 = vmul.f32 %v1374, 1.442695
        %v1387 = vpow.pop %v1386
        %v1388 = vmul.f32 %v1375, 1.442695
        %v1389 = vpow.pop %v1388
        %v1390 = vmul.f32 %v1376, 1.442695
        %v1391 = vpow.pop %v1390
        %v1392 = vmul.f32 %v1377, 1.442695
        %v1393 = vpow.pop %v1392
        %v1394 = vadd.f32 %v1379, 1.0
        %v1395 = vadd.f32 %v1381, 1.0
        %v1396 = vadd.f32 %v1383, 1.0
        %v1397 = vadd.f32 %v1385, 1.0
        %v1398 = vadd.f32 %v1387, 1.0
        %v1399 = vadd.f32 %v1389, 1.0
        %v1400 = vadd.f32 %v1391, 1.0
        %v1401 = vadd.f32 %v1393, 1.0
        %v1402 = vrcp.pop %v1394
        %v1403 = vrcp.pop %v1395
        %v1404 = vrcp.pop %v1396
        %v1405 = vrcp.pop %v1397
        %v1406 = vrcp.pop %v1398
        %v1407 = vrcp.pop %v1399
        %v1408 = vrcp.pop %v1400
        %v1409 = vrcp.pop %v1401
        %v1410 = vmul.f32 %v1362, %v1402
        %v1411 = vmul.f32 %v1363, %v1403
        %v1412 = vmul.f32 %v1364, %v1404
        %v1413 = vmul.f32 %v1365, %v1405
        %v1414 = vmul.f32 %v1366, %v1406
        %v1415 = vmul.f32 %v1367, %v1407
        %v1416 = vmul.f32 %v1368, %v1408
        %v1417 = vmul.f32 %v1369, %v1409
        %v1418 = vpack.c.bf16 %v1411, %v1410
        %v1419 = vpack.c.bf16 %v1413, %v1412
        %v1420 = vpack.c.bf16 %v1415, %v1414
        %v1421 = vpack.c.bf16 %v1417, %v1416
        %v1422 = vld [vmem:[%s10] sm:$0xf]
        %v1423 = vld [vmem:[%s10 + $0x4] sm:$0xf]
        %v1424 = vld [vmem:[%s10 + $0x8] sm:$0xf]
        %v1425 = vld [vmem:[%s10 + $0xc] sm:$0xf]
        %v1426 = vlaneseq
        %v1427 = vshrl.u32 %v1426, 7
        %v1428 = vsub.s32 0, %v1427
        %v1429 = vrot.slane %v961, %v1428
        %v1434 = vunpack.c.l.b16 %v1422
        %v1435 = vunpack.c.l.b16 %v1423
        %v1436 = vunpack.c.l.b16 %v1424
        %v1437 = vunpack.c.l.b16 %v1425
        %v1438 = vpack.c.b16 %v1435, %v1434
        %v1439 = vpack.c.b16 %v1437, %v1436
        %v1443 = vsel %vm1186, %v1418, 0
        %v1446 = vsel %vm1186, %v1419, 0
        %v1449 = vsel %vm1186, %v1420, 0
        %v1452 = vsel %vm1186, %v1421, 0
        %1454 = vmatprep.subr.bf16.mxu0 0
        %1455 = vmatpush1.bf16.msra.mxu0 %v1438
        %1456 = vmatprep.subr.bf16.mxu0 0
        %1457 = vmatpush1.bf16.msra.mxu0 %v1439
        %1458 = vmatprep.subr.bf16.mxu0 0
        %1459 = vmatpush1.bf16.msra.mxu0 0
        %1460 = vmatprep.subr.bf16.mxu0 0
        %1461 = vmatpush1.bf16.msra.mxu0 0
        %1462 = vmatprep.subr.bf16.mxu0 0
        %1463 = vmatpush1.bf16.msra.mxu0 0
        %1464 = vmatprep.subr.bf16.mxu0 0
        %1465 = vmatpush1.bf16.msra.mxu0 0
        %1466 = vmatprep.subr.bf16.mxu0 0
        %1467 = vmatpush1.bf16.msra.mxu0 0
        %1468 = vmatprep.subr.bf16.mxu0 0
        %1469 = vmatpush1.bf16.msra.mxu0 0
        %1470 = vmatprep.subr.bf16.mxu0 0
        %1471 = vmatpush1.bf16.msra.mxu0 0
        %1472 = vmatprep.subr.bf16.mxu0 0
        %1473 = vmatpush1.bf16.msra.mxu0 0
        %1474 = vmatprep.subr.bf16.mxu0 0
        %1475 = vmatpush1.bf16.msra.mxu0 0
        %1476 = vmatprep.subr.bf16.mxu0 0
        %1477 = vmatpush1.bf16.msra.mxu0 0
        %1478 = vmatprep.subr.bf16.mxu0 0
        %1479 = vmatpush1.bf16.msra.mxu0 0
        %1480 = vmatprep.subr.bf16.mxu0 0
        %1481 = vmatpush1.bf16.msra.mxu0 0
        %1482 = vmatprep.subr.bf16.mxu0 0
        %1483 = vmatpush1.bf16.msra.mxu0 0
        %1484 = vmatprep.subr.bf16.mxu0 0
        %1485 = vmatpush1.bf16.msra.mxu0 0
        %1486 = vmatprep.mubr.bf16.mxu0 0
        %1487 = vmatmul.mubr.bf16.gmra.mrb[0].mxu0 %v1443
        %v1488 = vpop.f32.mrb[0].mxu0
        %v1489 = vadd.f32 %v1429, %v1488
        %v1490 = vpop.f32.mrb[0].mxu0
        %v1491 = vpop.f32.mrb[0].mxu0
        %v1492 = vadd.f32 %v1429, %v1491
        %v1493 = vpop.f32.mrb[0].mxu0
        %1494 = vmatprep.mubr.bf16.mxu0 0
        %1495 = vmatmul.mubr.bf16.gmra.mrb[0].mxu0 %v1446
        %v1496 = vpop.f32.mrb[0].mxu0
        %v1497 = vadd.f32 %v1429, %v1496
        %v1498 = vpop.f32.mrb[0].mxu0
        %v1499 = vpop.f32.mrb[0].mxu0
        %v1500 = vadd.f32 %v1429, %v1499
        %v1501 = vpop.f32.mrb[0].mxu0
        %1502 = vmatprep.mubr.bf16.mxu0 0
        %1503 = vmatmul.mubr.bf16.gmra.mrb[0].mxu0 %v1449
        %v1504 = vpop.f32.mrb[0].mxu0
        %v1505 = vadd.f32 %v1429, %v1504
        %v1506 = vpop.f32.mrb[0].mxu0
        %v1507 = vpop.f32.mrb[0].mxu0
        %v1508 = vadd.f32 %v1429, %v1507
        %v1509 = vpop.f32.mrb[0].mxu0
        %1510 = vmatprep.mubr.bf16.mxu0 0
        %1511 = vmatmul.mubr.bf16.gmra.mrb[0].mxu0 %v1452
        %v1512 = vpop.f32.mrb[0].mxu0
        %v1513 = vadd.f32 %v1429, %v1512
        %v1514 = vpop.f32.mrb[0].mxu0
        %v1515 = vpop.f32.mrb[0].mxu0
        %v1516 = vadd.f32 %v1429, %v1515
        %v1517 = vpop.f32.mrb[0].mxu0
        %1518 = vdwg.mxu0
        %v1519 = vsub.f32 0.0, %v1489
        %v1520 = vsub.f32 0.0, %v1492
        %v1521 = vsub.f32 0.0, %v1497
        %v1522 = vsub.f32 0.0, %v1500
        %v1523 = vsub.f32 0.0, %v1505
        %v1524 = vsub.f32 0.0, %v1508
        %v1525 = vsub.f32 0.0, %v1513
        %v1526 = vsub.f32 0.0, %v1516
        %v1527 = vmul.f32 %v1519, 1.442695
        %v1528 = vpow.pop %v1527
        %v1529 = vmul.f32 %v1520, 1.442695
        %v1530 = vpow.pop %v1529
        %v1531 = vmul.f32 %v1521, 1.442695
        %v1532 = vpow.pop %v1531
        %v1533 = vmul.f32 %v1522, 1.442695
        %v1534 = vpow.pop %v1533
        %v1535 = vmul.f32 %v1523, 1.442695
        %v1536 = vpow.pop %v1535
        %v1537 = vmul.f32 %v1524, 1.442695
        %v1538 = vpow.pop %v1537
        %v1539 = vmul.f32 %v1525, 1.442695
        %v1540 = vpow.pop %v1539
        %v1541 = vmul.f32 %v1526, 1.442695
        %v1542 = vpow.pop %v1541
        %v1543 = vadd.f32 %v1528, 1.0
        %v1544 = vadd.f32 %v1530, 1.0
        %v1545 = vadd.f32 %v1532, 1.0
        %v1546 = vadd.f32 %v1534, 1.0
        %v1547 = vadd.f32 %v1536, 1.0
        %v1548 = vadd.f32 %v1538, 1.0
        %v1549 = vadd.f32 %v1540, 1.0
        %v1550 = vadd.f32 %v1542, 1.0
        %v1551 = vrcp.pop %v1543
        %v1552 = vrcp.pop %v1544
        %v1553 = vrcp.pop %v1545
        %v1554 = vrcp.pop %v1546
        %v1555 = vrcp.pop %v1547
        %v1556 = vrcp.pop %v1548
        %v1557 = vrcp.pop %v1549
        %v1558 = vrcp.pop %v1550
        %v1559 = vmul.f32 %v1489, %v1551
        %v1560 = vmul.f32 %v1492, %v1552
        %v1561 = vmul.f32 %v1497, %v1553
        %v1562 = vmul.f32 %v1500, %v1554
        %v1563 = vmul.f32 %v1505, %v1555
        %v1564 = vmul.f32 %v1508, %v1556
        %v1565 = vmul.f32 %v1513, %v1557
        %v1566 = vmul.f32 %v1516, %v1558
        %v1567 = vld [vmem:[#allocation2] sm:$0xff]
        %v1568 = vsel %vm1186, %v1559, 0.0
        %v1569 = vrot.slane %v1568, 4
        %v1570 = vadd.f32 %v1568, %v1569
        %v1571 = vrot.slane %v1570, 2
        %v1572 = vadd.f32 %v1570, %v1571
        %v1573 = vrot.slane %v1572, 1
        %v1574 = vadd.f32 %v1572, %v1573
        %v1575 = vsel %vm1186, %v1560, 0.0
        %v1576 = vrot.slane %v1575, 4
        %v1577 = vadd.f32 %v1575, %v1576
        %v1578 = vrot.slane %v1577, 2
        %v1579 = vadd.f32 %v1577, %v1578
        %v1580 = vrot.slane %v1579, 1
        %v1581 = vadd.f32 %v1579, %v1580
        %v1582 = vsel %vm1186, %v1561, 0.0
        %v1583 = vrot.slane %v1582, 4
        %v1584 = vadd.f32 %v1582, %v1583
        %v1585 = vrot.slane %v1584, 2
        %v1586 = vadd.f32 %v1584, %v1585
        %v1587 = vrot.slane %v1586, 1
        %v1588 = vadd.f32 %v1586, %v1587
        %v1589 = vsel %vm1186, %v1562, 0.0
        %v1590 = vrot.slane %v1589, 4
        %v1591 = vadd.f32 %v1589, %v1590
        %v1592 = vrot.slane %v1591, 2
        %v1593 = vadd.f32 %v1591, %v1592
        %v1594 = vrot.slane %v1593, 1
        %v1595 = vadd.f32 %v1593, %v1594
        %v1596 = vsel %vm1186, %v1563, 0.0
        %v1597 = vrot.slane %v1596, 4
        %v1598 = vadd.f32 %v1596, %v1597
        %v1599 = vrot.slane %v1598, 2
        %v1600 = vadd.f32 %v1598, %v1599
        %v1601 = vrot.slane %v1600, 1
        %v1602 = vadd.f32 %v1600, %v1601
        %v1603 = vsel %vm1186, %v1564, 0.0
        %v1604 = vrot.slane %v1603, 4
        %v1605 = vadd.f32 %v1603, %v1604
        %v1606 = vrot.slane %v1605, 2
        %v1607 = vadd.f32 %v1605, %v1606
        %v1608 = vrot.slane %v1607, 1
        %v1609 = vadd.f32 %v1607, %v1608
        %v1610 = vsel %vm1186, %v1565, 0.0
        %v1611 = vrot.slane %v1610, 4
        %v1612 = vadd.f32 %v1610, %v1611
        %v1613 = vrot.slane %v1612, 2
        %v1614 = vadd.f32 %v1612, %v1613
        %v1615 = vrot.slane %v1614, 1
        %v1616 = vadd.f32 %v1614, %v1615
        %v1617 = vsel %vm1186, %v1566, 0.0
        %v1618 = vrot.slane %v1617, 4
        %v1619 = vadd.f32 %v1617, %v1618
        %v1620 = vrot.slane %v1619, 2
        %v1621 = vadd.f32 %v1619, %v1620
        %v1622 = vrot.slane %v1621, 1
        %v1623 = vadd.f32 %v1621, %v1622
        %vm1632 = vcmask 1041409
        %v1633 = vsel %vm1632, %v1581, %v1574
        %vm1634 = vcmask 1042434
        %v1635 = vsel %vm1634, %v1588, %v1633
        %vm1636 = vcmask 1043459
        %v1637 = vsel %vm1636, %v1595, %v1635
        %vm1638 = vcmask 1044484
        %v1639 = vsel %vm1638, %v1602, %v1637
        %vm1640 = vcmask 1045509
        %v1641 = vsel %vm1640, %v1609, %v1639
        %vm1642 = vcmask 1046534
        %v1643 = vsel %vm1642, %v1616, %v1641
        %vm1644 = vcmask 1047559
        %v1645 = vsel %vm1644, %v1623, %v1643
        %v1647 = vadd.f32 %v1567, %v1645
        %1648 = vst.msk [vmem:[#allocation2] sm:$0xff] %vm1186, %v1647
        %v1649 = vld [vmem:[#allocation17] sm:$0xff]
        %v1650 = vld [vmem:[#allocation17 + $0x8] sm:$0xff]
        %v1651 = vld [vmem:[#allocation17 + $0x10] sm:$0xff]
        %v1652 = vld [vmem:[#allocation17 + $0x18] sm:$0xff]
        %v1653 = vlaneseq
        %v1654 = vshrl.u32 %v1653, 7
        %v1655 = vsub.s32 1, %v1654
        %v1656 = vrot.slane %v961, %v1655
        %v1658 = vsel %vm1186, %v1559, 0
        %v1661 = vsel %vm1186, %v1560, 0
        %v1664 = vsel %vm1186, %v1561, 0
        %v1667 = vsel %vm1186, %v1562, 0
        %v1670 = vsel %vm1186, %v1563, 0
        %v1673 = vsel %vm1186, %v1564, 0
        %v1676 = vsel %vm1186, %v1565, 0
        %v1679 = vsel %vm1186, %v1566, 0
        %1681 = vmatprep.subr.mxu0 0.0
        %1682 = vmatpush1.msra.mxu0 %v1649
        %1683 = vmatprep.subr.mxu0 0.0
        %1684 = vmatpush1.msra.mxu0 %v1650
        %1685 = vmatprep.subr.mxu0 0.0
        %1686 = vmatpush1.msra.mxu0 %v1651
        %1687 = vmatprep.subr.mxu0 0.0
        %1688 = vmatpush1.msra.mxu0 %v1652
        %1689 = vmatprep.subr.mxu0 0.0
        %1690 = vmatpush1.msra.mxu0 0.0
        %1691 = vmatprep.subr.mxu0 0.0
        %1692 = vmatpush1.msra.mxu0 0.0
        %1693 = vmatprep.subr.mxu0 0.0
        %1694 = vmatpush1.msra.mxu0 0.0
        %1695 = vmatprep.subr.mxu0 0.0
        %1696 = vmatpush1.msra.mxu0 0.0
        %1697 = vmatprep.subr.mxu0 0.0
        %1698 = vmatpush1.msra.mxu0 0.0
        %1699 = vmatprep.subr.mxu0 0.0
        %1700 = vmatpush1.msra.mxu0 0.0
        %1701 = vmatprep.subr.mxu0 0.0
        %1702 = vmatpush1.msra.mxu0 0.0
        %1703 = vmatprep.subr.mxu0 0.0
        %1704 = vmatpush1.msra.mxu0 0.0
        %1705 = vmatprep.subr.mxu0 0.0
        %1706 = vmatpush1.msra.mxu0 0.0
        %1707 = vmatprep.subr.mxu0 0.0
        %1708 = vmatpush1.msra.mxu0 0.0
        %1709 = vmatprep.subr.mxu0 0.0
        %1710 = vmatpush1.msra.mxu0 0.0
        %1711 = vmatprep.subr.mxu0 0.0
        %1712 = vmatpush1.msra.mxu0 0.0
        %1713 = vmatprep.subr.mxu0 0.0
        %1714 = vmatpush1.msra.mxu0 0.0
        %1715 = vmatprep.subr.mxu0 0.0
        %1716 = vmatpush1.msra.mxu0 0.0
        %1717 = vmatprep.subr.mxu0 0.0
        %1718 = vmatpush1.msra.mxu0 0.0
        %1719 = vmatprep.subr.mxu0 0.0
        %1720 = vmatpush1.msra.mxu0 0.0
        %1721 = vmatprep.subr.mxu0 0.0
        %1722 = vmatpush1.msra.mxu0 0.0
        %1723 = vmatprep.subr.mxu0 0.0
        %1724 = vmatpush1.msra.mxu0 0.0
        %1725 = vmatprep.subr.mxu0 0.0
        %1726 = vmatpush1.msra.mxu0 0.0
        %1727 = vmatprep.subr.mxu0 0.0
        %1728 = vmatpush1.msra.mxu0 0.0
        %1729 = vmatprep.subr.mxu0 0.0
        %1730 = vmatpush1.msra.mxu0 0.0
        %1731 = vmatprep.subr.mxu0 0.0
        %1732 = vmatpush1.msra.mxu0 0.0
        %1733 = vmatprep.subr.mxu0 0.0
        %1734 = vmatpush1.msra.mxu0 0.0
        %1735 = vmatprep.subr.mxu0 0.0
        %1736 = vmatpush1.msra.mxu0 0.0
        %1737 = vmatprep.subr.mxu0 0.0
        %1738 = vmatpush1.msra.mxu0 0.0
        %1739 = vmatprep.subr.mxu0 0.0
        %1740 = vmatpush1.msra.mxu0 0.0
        %1741 = vmatprep.subr.mxu0 0.0
        %1742 = vmatpush1.msra.mxu0 0.0
        %1743 = vmatprep.subr.mxu0 0.0
        %1744 = vmatpush1.msra.mxu0 0.0
        %1745 = vmatprep.mubr.f32.mxu0 0.0
        %1746 = vmatmul.mubr.f32.gmra.mrb[0].mxu0 %v1658
        %v1747 = vpop.f32.mrb[0].mxu0
        %v1748 = vadd.f32 %v1656, %v1747
        %v1749 = vpop.f32.mrb[0].mxu0
        %1750 = vmatprep.mubr.f32.mxu0 0.0
        %1751 = vmatmul.mubr.f32.gmra.mrb[0].mxu0 %v1661
        %v1752 = vpop.f32.mrb[0].mxu0
        %v1753 = vadd.f32 %v1656, %v1752
        %v1754 = vpop.f32.mrb[0].mxu0
        %1755 = vmatprep.mubr.f32.mxu0 0.0
        %1756 = vmatmul.mubr.f32.gmra.mrb[0].mxu0 %v1664
        %v1757 = vpop.f32.mrb[0].mxu0
        %v1758 = vadd.f32 %v1656, %v1757
        %v1759 = vpop.f32.mrb[0].mxu0
        %1760 = vmatprep.mubr.f32.mxu0 0.0
        %1761 = vmatmul.mubr.f32.gmra.mrb[0].mxu0 %v1667
        %v1762 = vpop.f32.mrb[0].mxu0
        %v1763 = vadd.f32 %v1656, %v1762
        %v1764 = vpop.f32.mrb[0].mxu0
        %1765 = vmatprep.mubr.f32.mxu0 0.0
        %1766 = vmatmul.mubr.f32.gmra.mrb[0].mxu0 %v1670
        %v1767 = vpop.f32.mrb[0].mxu0
        %v1768 = vadd.f32 %v1656, %v1767
        %v1769 = vpop.f32.mrb[0].mxu0
        %1770 = vmatprep.mubr.f32.mxu0 0.0
        %1771 = vmatmul.mubr.f32.gmra.mrb[0].mxu0 %v1673
        %v1772 = vpop.f32.mrb[0].mxu0
        %v1773 = vadd.f32 %v1656, %v1772
        %v1774 = vpop.f32.mrb[0].mxu0
        %1775 = vmatprep.mubr.f32.mxu0 0.0
        %1776 = vmatmul.mubr.f32.gmra.mrb[0].mxu0 %v1676
        %v1777 = vpop.f32.mrb[0].mxu0
        %v1778 = vadd.f32 %v1656, %v1777
        %v1779 = vpop.f32.mrb[0].mxu0
        %1780 = vmatprep.mubr.f32.mxu0 0.0
        %1781 = vmatmul.mubr.f32.gmra.mrb[0].mxu0 %v1679
        %v1782 = vpop.f32.mrb[0].mxu0
        %v1783 = vadd.f32 %v1656, %v1782
        %v1784 = vpop.f32.mrb[0].mxu0
        %1785 = vdwg.mxu0
        %v1786 = vsub.f32 0.0, %v1748
        %v1787 = vsub.f32 0.0, %v1753
        %v1788 = vsub.f32 0.0, %v1758
        %v1789 = vsub.f32 0.0, %v1763
        %v1790 = vsub.f32 0.0, %v1768
        %v1791 = vsub.f32 0.0, %v1773
        %v1792 = vsub.f32 0.0, %v1778
        %v1793 = vsub.f32 0.0, %v1783
        %v1794 = vmul.f32 %v1786, 1.442695
        %v1795 = vpow.pop %v1794
        %v1796 = vmul.f32 %v1787, 1.442695
        %v1797 = vpow.pop %v1796
        %v1798 = vmul.f32 %v1788, 1.442695
        %v1799 = vpow.pop %v1798
        %v1800 = vmul.f32 %v1789, 1.442695
        %v1801 = vpow.pop %v1800
        %v1802 = vmul.f32 %v1790, 1.442695
        %v1803 = vpow.pop %v1802
        %v1804 = vmul.f32 %v1791, 1.442695
        %v1805 = vpow.pop %v1804
        %v1806 = vmul.f32 %v1792, 1.442695
        %v1807 = vpow.pop %v1806
        %v1808 = vmul.f32 %v1793, 1.442695
        %v1809 = vpow.pop %v1808
        %v1810 = vadd.f32 %v1795, 1.0
        %v1811 = vadd.f32 %v1797, 1.0
        %v1812 = vadd.f32 %v1799, 1.0
        %v1813 = vadd.f32 %v1801, 1.0
        %v1814 = vadd.f32 %v1803, 1.0
        %v1815 = vadd.f32 %v1805, 1.0
        %v1816 = vadd.f32 %v1807, 1.0
        %v1817 = vadd.f32 %v1809, 1.0
        %v1818 = vrcp.pop %v1810
        %v1819 = vrcp.pop %v1811
        %v1820 = vrcp.pop %v1812
        %v1821 = vrcp.pop %v1813
        %v1822 = vrcp.pop %v1814
        %v1823 = vrcp.pop %v1815
        %v1824 = vrcp.pop %v1816
        %v1825 = vrcp.pop %v1817
        %v1826 = vmul.f32 %v1748, %v1818
        %v1827 = vmul.f32 %v1753, %v1819
        %v1828 = vmul.f32 %v1758, %v1820
        %v1829 = vmul.f32 %v1763, %v1821
        %v1830 = vmul.f32 %v1768, %v1822
        %v1831 = vmul.f32 %v1773, %v1823
        %v1832 = vmul.f32 %v1778, %v1824
        %v1833 = vmul.f32 %v1783, %v1825
        %v1834 = vlaneseq
        %v1835 = vshrl.u32 %v1834, 7
        %v1836 = vsub.s32 2, %v1835
        %v1837 = vrot.slane %v961, %v1836
        %v1838 = vmul.f32 %v1826, %v1837
        %v1839 = vmul.f32 %v1827, %v1837
        %v1840 = vmul.f32 %v1828, %v1837
        %v1841 = vmul.f32 %v1829, %v1837
        %v1842 = vmul.f32 %v1830, %v1837
        %v1843 = vmul.f32 %v1831, %v1837
        %v1844 = vmul.f32 %v1832, %v1837
        %v1845 = vmul.f32 %v1833, %v1837
        %v1846 = vsel %vm1186, %v1838, 0.0
        %1847 = vadd.xlane.f32.xlu0 %v1846
        %v1848 = vpop.xlane.xlu0 %1847
        %v1849 = vsel %vm1186, %v1839, 0.0
        %1850 = vadd.xlane.f32.xlu0 %v1849
        %v1851 = vpop.xlane.xlu0 %1850
        %v1852 = vsel %vm1186, %v1840, 0.0
        %1853 = vadd.xlane.f32.xlu0 %v1852
        %v1854 = vpop.xlane.xlu0 %1853
        %v1855 = vsel %vm1186, %v1841, 0.0
        %1856 = vadd.xlane.f32.xlu0 %v1855
        %v1857 = vpop.xlane.xlu0 %1856
        %v1858 = vsel %vm1186, %v1842, 0.0
        %1859 = vadd.xlane.f32.xlu0 %v1858
        %v1860 = vpop.xlane.xlu0 %1859
        %v1861 = vsel %vm1186, %v1843, 0.0
        %1862 = vadd.xlane.f32.xlu0 %v1861
        %v1863 = vpop.xlane.xlu0 %1862
        %v1864 = vsel %vm1186, %v1844, 0.0
        %1865 = vadd.xlane.f32.xlu0 %v1864
        %v1866 = vpop.xlane.xlu0 %1865
        %v1867 = vsel %vm1186, %v1845, 0.0
        %1868 = vadd.xlane.f32.xlu0 %v1867
        %v1869 = vpop.xlane.xlu0 %1868
        %v1870 = vlaneseq
        %v1871 = vshrl.u32 %v1870, 7
        %v1872 = vsub.s32 3, %v1871
        %v1873 = vrot.slane %v961, %v1872
        %v1874 = vadd.f32 %v1848, %v1873
        %v1875 = vadd.f32 %v1851, %v1873
        %v1876 = vadd.f32 %v1854, %v1873
        %v1877 = vadd.f32 %v1857, %v1873
        %v1878 = vadd.f32 %v1860, %v1873
        %v1879 = vadd.f32 %v1863, %v1873
        %v1880 = vadd.f32 %v1866, %v1873
        %v1881 = vadd.f32 %v1869, %v1873
        %v1882 = vld [vmem:[#allocation3] sm:$0xff]
        %vm1883 = vcmask 7168
        %v1884 = vsel %vm1883, %v1874, 0.0
        %v1885 = vrot.slane %v1884, 4
        %v1886 = vadd.f32 %v1884, %v1885
        %v1887 = vrot.slane %v1886, 2
        %v1888 = vadd.f32 %v1886, %v1887
        %v1889 = vrot.slane %v1888, 1
        %v1890 = vadd.f32 %v1888, %v1889
        %v1891 = vsel %vm1883, %v1875, 0.0
        %v1892 = vrot.slane %v1891, 4
        %v1893 = vadd.f32 %v1891, %v1892
        %v1894 = vrot.slane %v1893, 2
        %v1895 = vadd.f32 %v1893, %v1894
        %v1896 = vrot.slane %v1895, 1
        %v1897 = vadd.f32 %v1895, %v1896
        %v1898 = vsel %vm1883, %v1876, 0.0
        %v1899 = vrot.slane %v1898, 4
        %v1900 = vadd.f32 %v1898, %v1899
        %v1901 = vrot.slane %v1900, 2
        %v1902 = vadd.f32 %v1900, %v1901
        %v1903 = vrot.slane %v1902, 1
        %v1904 = vadd.f32 %v1902, %v1903
        %v1905 = vsel %vm1883, %v1877, 0.0
        %v1906 = vrot.slane %v1905, 4
        %v1907 = vadd.f32 %v1905, %v1906
        %v1908 = vrot.slane %v1907, 2
        %v1909 = vadd.f32 %v1907, %v1908
        %v1910 = vrot.slane %v1909, 1
        %v1911 = vadd.f32 %v1909, %v1910
        %v1912 = vsel %vm1883, %v1878, 0.0
        %v1913 = vrot.slane %v1912, 4
        %v1914 = vadd.f32 %v1912, %v1913
        %v1915 = vrot.slane %v1914, 2
        %v1916 = vadd.f32 %v1914, %v1915
        %v1917 = vrot.slane %v1916, 1
        %v1918 = vadd.f32 %v1916, %v1917
        %v1919 = vsel %vm1883, %v1879, 0.0
        %v1920 = vrot.slane %v1919, 4
        %v1921 = vadd.f32 %v1919, %v1920
        %v1922 = vrot.slane %v1921, 2
        %v1923 = vadd.f32 %v1921, %v1922
        %v1924 = vrot.slane %v1923, 1
        %v1925 = vadd.f32 %v1923, %v1924
        %v1926 = vsel %vm1883, %v1880, 0.0
        %v1927 = vrot.slane %v1926, 4
        %v1928 = vadd.f32 %v1926, %v1927
        %v1929 = vrot.slane %v1928, 2
        %v1930 = vadd.f32 %v1928, %v1929
        %v1931 = vrot.slane %v1930, 1
        %v1932 = vadd.f32 %v1930, %v1931
        %v1933 = vsel %vm1883, %v1881, 0.0
        %v1934 = vrot.slane %v1933, 4
        %v1935 = vadd.f32 %v1933, %v1934
        %v1936 = vrot.slane %v1935, 2
        %v1937 = vadd.f32 %v1935, %v1936
        %v1938 = vrot.slane %v1937, 1
        %v1939 = vadd.f32 %v1937, %v1938
        %v1948 = vsel %vm1632, %v1897, %v1890
        %v1949 = vsel %vm1634, %v1904, %v1948
        %v1950 = vsel %vm1636, %v1911, %v1949
        %v1951 = vsel %vm1638, %v1918, %v1950
        %v1952 = vsel %vm1640, %v1925, %v1951
        %v1953 = vsel %vm1642, %v1932, %v1952
        %v1954 = vsel %vm1644, %v1939, %v1953
        %v1956 = vadd.f32 %v1882, %v1954
        %1957 = vst.msk [vmem:[#allocation3] sm:$0xff] %vm1883, %v1956
        %v1958 = vld [vmem:[#allocation4] sm:$0xff]
        %1960 = vset.pattern.permute.xlu0 0
        %1961 = vperm.xlu0 %1960, %v1874
        %v1962 = vpop.permute.xlu0 %1961
        %1965 = vset.pattern.permute.xlu0 0
        %1966 = vperm.xlu0 %1965, %v1875
        %v1967 = vpop.permute.xlu0 %1966
        %1970 = vset.pattern.permute.xlu0 0
        %1971 = vperm.xlu0 %1970, %v1876
        %v1972 = vpop.permute.xlu0 %1971
        %1975 = vset.pattern.permute.xlu0 0
        %1976 = vperm.xlu0 %1975, %v1877
        %v1977 = vpop.permute.xlu0 %1976
        %1980 = vset.pattern.permute.xlu0 0
        %1981 = vperm.xlu0 %1980, %v1878
        %v1982 = vpop.permute.xlu0 %1981
        %1985 = vset.pattern.permute.xlu0 0
        %1986 = vperm.xlu0 %1985, %v1879
        %v1987 = vpop.permute.xlu0 %1986
        %1990 = vset.pattern.permute.xlu0 0
        %1991 = vperm.xlu0 %1990, %v1880
        %v1992 = vpop.permute.xlu0 %1991
        %1995 = vset.pattern.permute.xlu0 0
        %1996 = vperm.xlu0 %1995, %v1881
        %v1997 = vpop.permute.xlu0 %1996
        %v1999 = vmul.f32 %v1962, %v960
        %v2000 = vmul.f32 %v1967, %v960
        %v2001 = vmul.f32 %v1972, %v960
        %v2002 = vmul.f32 %v1977, %v960
        %v2003 = vmul.f32 %v1982, %v960
        %v2004 = vmul.f32 %v1987, %v960
        %v2005 = vmul.f32 %v1992, %v960
        %v2006 = vmul.f32 %v1997, %v960
        %vm2007 = vcmask 23552
        %v2008 = vsel %vm2007, %v1999, 0.0
        %v2009 = vrot.slane %v2008, 4
        %v2010 = vadd.f32 %v2008, %v2009
        %v2011 = vrot.slane %v2010, 2
        %v2012 = vadd.f32 %v2010, %v2011
        %v2013 = vrot.slane %v2012, 1
        %v2014 = vadd.f32 %v2012, %v2013
        %v2015 = vsel %vm2007, %v2000, 0.0
        %v2016 = vrot.slane %v2015, 4
        %v2017 = vadd.f32 %v2015, %v2016
        %v2018 = vrot.slane %v2017, 2
        %v2019 = vadd.f32 %v2017, %v2018
        %v2020 = vrot.slane %v2019, 1
        %v2021 = vadd.f32 %v2019, %v2020
        %v2022 = vsel %vm2007, %v2001, 0.0
        %v2023 = vrot.slane %v2022, 4
        %v2024 = vadd.f32 %v2022, %v2023
        %v2025 = vrot.slane %v2024, 2
        %v2026 = vadd.f32 %v2024, %v2025
        %v2027 = vrot.slane %v2026, 1
        %v2028 = vadd.f32 %v2026, %v2027
        %v2029 = vsel %vm2007, %v2002, 0.0
        %v2030 = vrot.slane %v2029, 4
        %v2031 = vadd.f32 %v2029, %v2030
        %v2032 = vrot.slane %v2031, 2
        %v2033 = vadd.f32 %v2031, %v2032
        %v2034 = vrot.slane %v2033, 1
        %v2035 = vadd.f32 %v2033, %v2034
        %v2036 = vsel %vm2007, %v2003, 0.0
        %v2037 = vrot.slane %v2036, 4
        %v2038 = vadd.f32 %v2036, %v2037
        %v2039 = vrot.slane %v2038, 2
        %v2040 = vadd.f32 %v2038, %v2039
        %v2041 = vrot.slane %v2040, 1
        %v2042 = vadd.f32 %v2040, %v2041
        %v2043 = vsel %vm2007, %v2004, 0.0
        %v2044 = vrot.slane %v2043, 4
        %v2045 = vadd.f32 %v2043, %v2044
        %v2046 = vrot.slane %v2045, 2
        %v2047 = vadd.f32 %v2045, %v2046
        %v2048 = vrot.slane %v2047, 1
        %v2049 = vadd.f32 %v2047, %v2048
        %v2050 = vsel %vm2007, %v2005, 0.0
        %v2051 = vrot.slane %v2050, 4
        %v2052 = vadd.f32 %v2050, %v2051
        %v2053 = vrot.slane %v2052, 2
        %v2054 = vadd.f32 %v2052, %v2053
        %v2055 = vrot.slane %v2054, 1
        %v2056 = vadd.f32 %v2054, %v2055
        %v2057 = vsel %vm2007, %v2006, 0.0
        %v2058 = vrot.slane %v2057, 4
        %v2059 = vadd.f32 %v2057, %v2058
        %v2060 = vrot.slane %v2059, 2
        %v2061 = vadd.f32 %v2059, %v2060
        %v2062 = vrot.slane %v2061, 1
        %v2063 = vadd.f32 %v2061, %v2062
        %v2072 = vsel %vm1632, %v2021, %v2014
        %v2073 = vsel %vm1634, %v2028, %v2072
        %v2074 = vsel %vm1636, %v2035, %v2073
        %v2075 = vsel %vm1638, %v2042, %v2074
        %v2076 = vsel %vm1640, %v2049, %v2075
        %v2077 = vsel %vm1642, %v2056, %v2076
        %v2078 = vsel %vm1644, %v2063, %v2077
        %v2080 = vadd.f32 %v1958, %v2078
        %2081 = vst.msk [vmem:[#allocation4] sm:$0xff] %vm2007, %v2080
        %p2082 = scmp.eq.s32.totalorder %s50, 1
        // Predicated region
        $region121: #{tpu_custom_call.1} parent=83 // pred_check
          %p2083 = pneg %p2082
        $region122: #{tpu_custom_call.1} parent=83 // pred_check_branch
          %2085 = sbr.rel (%p2083) target = $region124
        $region123: #{tpu_custom_call.1} parent=83 // pred_region
          %v2086 = vld [vmem:[%s15] sm:$0x7]
          %v2087 = vld [vmem:[%s747] sm:$0xff]
          %v2088 = vld [vmem:[%s918] sm:$0xff]
          %v2089 = vld [vmem:[#allocation2] sm:$0xff]
          %v2090 = vld [vmem:[#allocation14] sm:$0xff]
          %v2091 = vld [vmem:[#allocation14 + $0x8] sm:$0xff]
          %v2092 = vld [vmem:[#allocation14 + $0x10] sm:$0xff]
          %v2093 = vld [vmem:[#allocation14 + $0x18] sm:$0xff]
          %v2095 = vsel %vm1186, %v2089, 0
          %2097 = vmatprep.subr.mxu0 0.0
          %2098 = vmatpush1.msra.mxu0 %v2090
          %2099 = vmatprep.subr.mxu0 0.0
          %2100 = vmatpush1.msra.mxu0 %v2091
          %2101 = vmatprep.subr.mxu0 0.0
          %2102 = vmatpush1.msra.mxu0 %v2092
          %2103 = vmatprep.subr.mxu0 0.0
          %2104 = vmatpush1.msra.mxu0 %v2093
          %2105 = vmatprep.subr.mxu0 0.0
          %2106 = vmatpush1.msra.mxu0 0.0
          %2107 = vmatprep.subr.mxu0 0.0
          %2108 = vmatpush1.msra.mxu0 0.0
          %2109 = vmatprep.subr.mxu0 0.0
          %2110 = vmatpush1.msra.mxu0 0.0
          %2111 = vmatprep.subr.mxu0 0.0
          %2112 = vmatpush1.msra.mxu0 0.0
          %2113 = vmatprep.subr.mxu0 0.0
          %2114 = vmatpush1.msra.mxu0 0.0
          %2115 = vmatprep.subr.mxu0 0.0
          %2116 = vmatpush1.msra.mxu0 0.0
          %2117 = vmatprep.subr.mxu0 0.0
          %2118 = vmatpush1.msra.mxu0 0.0
          %2119 = vmatprep.subr.mxu0 0.0
          %2120 = vmatpush1.msra.mxu0 0.0
          %2121 = vmatprep.subr.mxu0 0.0
          %2122 = vmatpush1.msra.mxu0 0.0
          %2123 = vmatprep.subr.mxu0 0.0
          %2124 = vmatpush1.msra.mxu0 0.0
          %2125 = vmatprep.subr.mxu0 0.0
          %2126 = vmatpush1.msra.mxu0 0.0
          %2127 = vmatprep.subr.mxu0 0.0
          %2128 = vmatpush1.msra.mxu0 0.0
          %2129 = vmatprep.subr.mxu0 0.0
          %2130 = vmatpush1.msra.mxu0 0.0
          %2131 = vmatprep.subr.mxu0 0.0
          %2132 = vmatpush1.msra.mxu0 0.0
          %2133 = vmatprep.subr.mxu0 0.0
          %2134 = vmatpush1.msra.mxu0 0.0
          %2135 = vmatprep.subr.mxu0 0.0
          %2136 = vmatpush1.msra.mxu0 0.0
          %2137 = vmatprep.subr.mxu0 0.0
          %2138 = vmatpush1.msra.mxu0 0.0
          %2139 = vmatprep.subr.mxu0 0.0
          %2140 = vmatpush1.msra.mxu0 0.0
          %2141 = vmatprep.subr.mxu0 0.0
          %2142 = vmatpush1.msra.mxu0 0.0
          %2143 = vmatprep.subr.mxu0 0.0
          %2144 = vmatpush1.msra.mxu0 0.0
          %2145 = vmatprep.subr.mxu0 0.0
          %2146 = vmatpush1.msra.mxu0 0.0
          %2147 = vmatprep.subr.mxu0 0.0
          %2148 = vmatpush1.msra.mxu0 0.0
          %2149 = vmatprep.subr.mxu0 0.0
          %2150 = vmatpush1.msra.mxu0 0.0
          %2151 = vmatprep.subr.mxu0 0.0
          %2152 = vmatpush1.msra.mxu0 0.0
          %2153 = vmatprep.subr.mxu0 0.0
          %2154 = vmatpush1.msra.mxu0 0.0
          %2155 = vmatprep.subr.mxu0 0.0
          %2156 = vmatpush1.msra.mxu0 0.0
          %2157 = vmatprep.subr.mxu0 0.0
          %2158 = vmatpush1.msra.mxu0 0.0
          %2159 = vmatprep.subr.mxu0 0.0
          %2160 = vmatpush1.msra.mxu0 0.0
          %2161 = vmatprep.mubr.f32.mxu0 0.0
          %2162 = vmatmul.mubr.f32.gmra.mrb[0].mxu0 %v2095
          %v2163 = vpop.f32.mrb[0].mxu0
          %v2164 = vadd.f32 0.0, %v2163
          %v2165 = vpop.f32.mrb[0].mxu0
          %2166 = vdwg.mxu0
          %v2167 = vadd.f32 %v2087, %v2164
          %v2168 = vsub.f32 0.0, %v2167
          %v2169 = vmul.f32 %v2168, 1.442695
          %v2170 = vpow.pop %v2169
          %v2171 = vadd.f32 %v2170, 1.0
          %v2172 = vrcp.pop %v2171
          %v2173 = vmul.f32 %v2167, %v2172
          %v2174 = vld [vmem:[#allocation16] sm:$0xff]
          %v2175 = vld [vmem:[#allocation16 + $0x8] sm:$0xff]
          %v2176 = vld [vmem:[#allocation16 + $0x10] sm:$0xff]
          %v2177 = vld [vmem:[#allocation16 + $0x18] sm:$0xff]
          %v2178 = vlaneseq
          %v2179 = vshrl.u32 %v2178, 7
          %v2180 = vsub.s32 0, %v2179
          %v2181 = vrot.slane %v2086, %v2180
          %v2183 = vsel %vm1186, %v2173, 0
          %2185 = vmatprep.subr.mxu0 0.0
          %2186 = vmatpush1.msra.mxu0 %v2174
          %2187 = vmatprep.subr.mxu0 0.0
          %2188 = vmatpush1.msra.mxu0 %v2175
          %2189 = vmatprep.subr.mxu0 0.0
          %2190 = vmatpush1.msra.mxu0 %v2176
          %2191 = vmatprep.subr.mxu0 0.0
          %2192 = vmatpush1.msra.mxu0 %v2177
          %2193 = vmatprep.subr.mxu0 0.0
          %2194 = vmatpush1.msra.mxu0 0.0
          %2195 = vmatprep.subr.mxu0 0.0
          %2196 = vmatpush1.msra.mxu0 0.0
          %2197 = vmatprep.subr.mxu0 0.0
          %2198 = vmatpush1.msra.mxu0 0.0
          %2199 = vmatprep.subr.mxu0 0.0
          %2200 = vmatpush1.msra.mxu0 0.0
          %2201 = vmatprep.subr.mxu0 0.0
          %2202 = vmatpush1.msra.mxu0 0.0
          %2203 = vmatprep.subr.mxu0 0.0
          %2204 = vmatpush1.msra.mxu0 0.0
          %2205 = vmatprep.subr.mxu0 0.0
          %2206 = vmatpush1.msra.mxu0 0.0
          %2207 = vmatprep.subr.mxu0 0.0
          %2208 = vmatpush1.msra.mxu0 0.0
          %2209 = vmatprep.subr.mxu0 0.0
          %2210 = vmatpush1.msra.mxu0 0.0
          %2211 = vmatprep.subr.mxu0 0.0
          %2212 = vmatpush1.msra.mxu0 0.0
          %2213 = vmatprep.subr.mxu0 0.0
          %2214 = vmatpush1.msra.mxu0 0.0
          %2215 = vmatprep.subr.mxu0 0.0
          %2216 = vmatpush1.msra.mxu0 0.0
          %2217 = vmatprep.subr.mxu0 0.0
          %2218 = vmatpush1.msra.mxu0 0.0
          %2219 = vmatprep.subr.mxu0 0.0
          %2220 = vmatpush1.msra.mxu0 0.0
          %2221 = vmatprep.subr.mxu0 0.0
          %2222 = vmatpush1.msra.mxu0 0.0
          %2223 = vmatprep.subr.mxu0 0.0
          %2224 = vmatpush1.msra.mxu0 0.0
          %2225 = vmatprep.subr.mxu0 0.0
          %2226 = vmatpush1.msra.mxu0 0.0
          %2227 = vmatprep.subr.mxu0 0.0
          %2228 = vmatpush1.msra.mxu0 0.0
          %2229 = vmatprep.subr.mxu0 0.0
          %2230 = vmatpush1.msra.mxu0 0.0
          %2231 = vmatprep.subr.mxu0 0.0
          %2232 = vmatpush1.msra.mxu0 0.0
          %2233 = vmatprep.subr.mxu0 0.0
          %2234 = vmatpush1.msra.mxu0 0.0
          %2235 = vmatprep.subr.mxu0 0.0
          %2236 = vmatpush1.msra.mxu0 0.0
          %2237 = vmatprep.subr.mxu0 0.0
          %2238 = vmatpush1.msra.mxu0 0.0
          %2239 = vmatprep.subr.mxu0 0.0
          %2240 = vmatpush1.msra.mxu0 0.0
          %2241 = vmatprep.subr.mxu0 0.0
          %2242 = vmatpush1.msra.mxu0 0.0
          %2243 = vmatprep.subr.mxu0 0.0
          %2244 = vmatpush1.msra.mxu0 0.0
          %2245 = vmatprep.subr.mxu0 0.0
          %2246 = vmatpush1.msra.mxu0 0.0
          %2247 = vmatprep.subr.mxu0 0.0
          %2248 = vmatpush1.msra.mxu0 0.0
          %2249 = vmatprep.mubr.f32.mxu0 0.0
          %2250 = vmatmul.mubr.f32.gmra.mrb[0].mxu0 %v2183
          %v2251 = vpop.f32.mrb[0].mxu0
          %v2252 = vadd.f32 %v2181, %v2251
          %v2253 = vpop.f32.mrb[0].mxu0
          %2254 = vdwg.mxu0
          %v2255 = vsel %vm1186, %v2252, 0.0
          %2256 = vadd.xlane.f32.xlu0 %v2255
          %v2257 = vpop.xlane.xlu0 %2256
          %v2258 = vrcp.pop 32.0
          %v2259 = vmul.f32 %v2257, %v2258
          %v2260 = vsub.f32 %v2252, %v2259
          %v2261 = vmul.f32 %v2260, %v2260
          %v2262 = vsel %vm1186, %v2261, 0.0
          %2263 = vadd.xlane.f32.xlu0 %v2262
          %v2264 = vpop.xlane.xlu0 %2263
          %v2265 = vmul.f32 %v2264, %v2258
          %v2266 = vadd.f32 %v2265, 1e-05
          %v2267 = vrsqrt.pop %v2266
          %v2268 = vmul.f32 %v2260, %v2267
          %v2269 = vlaneseq
          %v2270 = vshrl.u32 %v2269, 7
          %v2271 = vsub.s32 1, %v2270
          %v2272 = vrot.slane %v2086, %v2271
          %v2273 = vmul.f32 %v2268, %v2272
          %v2274 = vlaneseq
          %v2275 = vshrl.u32 %v2274, 7
          %v2276 = vsub.s32 2, %v2275
          %v2277 = vrot.slane %v2086, %v2276
          %v2278 = vadd.f32 %v2273, %v2277
          %2279 = vst.msk [vmem:[%s884] sm:$0xff] %vm1186, %v2278
          %v2280 = vld [vmem:[#allocation3] sm:$0xff]
          %2282 = vset.pattern.permute.xlu0 0
          %2283 = vperm.xlu0 %2282, %v2280
          %v2284 = vpop.permute.xlu0 %2283
          %v2286 = vmul.f32 %v2088, %v2284
          %v2287 = vld [vmem:[#allocation4] sm:$0xff]
          %v2288 = vsub.f32 %v2286, %v2287
          %2289 = vst.msk [vmem:[%s942] sm:$0xff] %vm2007, %v2288
        $region124: #{tpu_custom_call.1} parent=83 // pred_fallthru
          _
        %s2290 = sand.u32 %s471, 1
        %s2291 = scalar_lea.sflag [#allocation7], %s2290
        %s2292 = sand.u32 %s471, 1
        %s2293 = smul.addr %s2292, 8
        %s2294 = scalar_lea.vmem [#allocation19], %s2293
        %p2295 = scmp.lt.s32.totalorder %s48, 1
        %s2296 = scalar_select %p2295, %s48, 1
        %p2297 = scmp.lt.s32.totalorder %s49, 1
        %s2298 = scalar_select %p2297, %s49, 1
        %s2299 = smul.addr %s2296, 2
        %s2300 = sadd.s32 %s2298, %s2299
        %s2301 = smul.addr %s2300, 8
        %s2302 = scalar_lea.vmem %s17, %s2301
        // Predicated region
        $region125: #{tpu_custom_call.1} parent=83 // pred_check
          %p2303 = pneg %p481
        $region126: #{tpu_custom_call.1} parent=83 // pred_check_branch
          %2305 = sbr.rel (%p2303) target = $region128
        $region127: #{tpu_custom_call.1} parent=83 // pred_region
          %s2307 = ssub.s32 128, 128
          %2308 = vsyncadd %s2291, %s2307
          %s2309 = smul.addr %s48, 2
          %s2310 = sadd.s32 %s49, %s2309
          %s2311 = smul.addr %s2310, 128
          %s2312 = scalar_lea.hbm %s16, %s2311
          %s2314 = sshll.u32 %s2294, 4
          %s2315 = int_to_ptr.vmem [resolvable:$true] %s2314
          %2317 = dma.vmem_to_hbm [thread:$0]  %s2315, 128, %s2312, %s2291
        $region128: #{tpu_custom_call.1} parent=83 // pred_fallthru
          _
        // Predicated region
        $region129: #{tpu_custom_call.1} parent=83 // pred_check
          %p2318 = pneg %p509
        $region130: #{tpu_custom_call.1} parent=83 // pred_check_branch
          %2320 = sbr.rel (%p2318) target = $region132
        $region131: #{tpu_custom_call.1} parent=83 // pred_region
          _
        $region132: #{tpu_custom_call.1} parent=83 // pred_fallthru
          _
      $region84: #{tpu_custom_call.1} parent=5 // pred_fallthru
        _
      %p2321 = scmp.le.s32.totalorder 2, %s38
      // Predicated region
      $region133: #{tpu_custom_call.1} parent=5 // pred_check
        %p2322 = pneg %p2321
      $region134: #{tpu_custom_call.1} parent=5 // pred_check_branch
        %2324 = sbr.rel (%p2322) target = $region136
      $region135: #{tpu_custom_call.1} parent=5 // pred_region
        %s2325 = ssub.s32 %s38, 2
        // Predicated region
        $region137: #{tpu_custom_call.1} parent=135 // pred_check
          %p2326 = pneg %p487
        $region138: #{tpu_custom_call.1} parent=135 // pred_check_branch
          %2328 = sbr.rel (%p2326) target = $region140
        $region139: #{tpu_custom_call.1} parent=135 // pred_region
          %s2329 = sand.u32 %s472, 1
          %s2330 = scalar_lea.sflag [#allocation7], %s2329
          %s2331 = sand.u32 %s472, 1
          %s2332 = smul.addr %s2331, 8
          %s2333 = scalar_lea.vmem [#allocation19], %s2332
          %2334 = dma.done %s2330, 128
        $region140: #{tpu_custom_call.1} parent=135 // pred_fallthru
          _
        // Predicated region
        $region141: #{tpu_custom_call.1} parent=135 // pred_check
          %p2335 = pneg %p515
        $region142: #{tpu_custom_call.1} parent=135 // pred_check_branch
          %2337 = sbr.rel (%p2335) target = $region144
        $region143: #{tpu_custom_call.1} parent=135 // pred_region
          %p2338 = scmp.lt.s32.totalorder %s51, 1
          %s2339 = scalar_select %p2338, %s51, 1
          %p2340 = scmp.lt.s32.totalorder %s52, 1
          %s2341 = scalar_select %p2340, %s52, 1
          %s2342 = smul.addr %s2339, 2
          %s2343 = sadd.s32 %s2341, %s2342
          %s2344 = smul.addr %s2343, 8
          %s2345 = scalar_lea.vmem %s17, %s2344
        $region144: #{tpu_custom_call.1} parent=135 // pred_fallthru
          _
      $region136: #{tpu_custom_call.1} parent=5 // pred_fallthru
        _
    $region6: #{tpu_custom_call.1} parent=1 // loop_footer
      %s42 = sadd.s32 1, %s38
    $region7: #{tpu_custom_call.1} parent=1 // loop_footer_branch
      %37 = sbr.rel target = $region3
    $region8: #{tpu_custom_call.1} parent=1 // loop_exit
      _
    %2346 = vsyncpa [#allocation6], 1
    %s2347 = scalar_lea.sflag [#allocation6], 1
    %2348 = vsyncpa %s2347, 1
    %2349 = vsyncpa [#allocation9], 1
    %s2350 = scalar_lea.sflag [#allocation9], 1
    %2351 = vsyncpa %s2350, 1
    %2352 = vsyncpa [#allocation12], 1
    %s2353 = scalar_lea.sflag [#allocation12], 1
    %2354 = vsyncpa %s2353, 1
    %2355 = vsyncpa [#allocation15], 1
    %2356 = vsyncpa [#allocation18], 1
    %2357 = vsyncpa [#allocation7], 1
    %s2358 = scalar_lea.sflag [#allocation7], 1
    %2359 = vsyncpa %s2358, 1

</llo_original>
